<compile_context>
chip_gen: v7x
topology: tpu7x:2x2x1
jax: 0.10.0
libtpu: 0.0.40
codegen_flags: <defaults>
</compile_context>

<pallas_src>
import functools

import jax
import jax.numpy as jnp
from jax.experimental import pallas as pl
from jax.experimental.pallas import tpu as pltpu


def _round_up(x, m):
    return ((x + m - 1) // m) * m


def _cdiv(a, b):
    return (a + b - 1) // b


def _vmem_capacity_bytes():
    """Physical VMEM per core; conservative 64 MiB fallback (v7x floor)."""
    try:
        return int(pltpu.get_tpu_info().vmem_capacity_bytes)
    except Exception:
        return 64 * 2 ** 20


def _mim_head_kernel(x_ref, w1_ref, b1_ref, g_ref, beta_ref, w2_ref, b2_ref,
                     o_ref, h_ref, *, eps):
    # x_ref: (TM, H)        w1_ref: (H, H)    b1/g/beta: (1, H)
    # w2_ref: (H, TN)       b2_ref: (1, TN)   o_ref: (TM, TN)
    # h_ref:  (TM, H) VMEM scratch holding the post-LayerNorm activation.

    @pl.when(pl.program_id(1) == 0)
    def _():
        # dense: x @ W1 + b1 (MXU, native-dtype operands, f32 accumulation)
        h = jnp.dot(x_ref[...], w1_ref[...],
                    preferred_element_type=jnp.float32)
        h = h + b1_ref[...].astype(jnp.float32)

        # exact gelu (erf based), matches torch GELU / ACT2FN["gelu"]
        h = 0.5 * h * (1.0 + jax.lax.erf(h * jnp.float32(0.7071067811865476)))

        # LayerNorm over the hidden dimension (f32 math)
        mean = jnp.mean(h, axis=-1, keepdims=True)
        var = jnp.mean(jnp.square(h - mean), axis=-1, keepdims=True)
        h = (h - mean) * jax.lax.rsqrt(var + jnp.float32(eps))
        h = h * g_ref[...].astype(jnp.float32) + beta_ref[...].astype(jnp.float32)

        h_ref[...] = h.astype(h_ref.dtype)

    # decoder tile: h @ W2[:, tile] + bias[tile]  (MXU)
    y = jnp.dot(h_ref[...], w2_ref[...], preferred_element_type=jnp.float32)
    y = y + b2_ref[...].astype(jnp.float32)
    o_ref[...] = y.astype(o_ref.dtype)


def mim_prediction_head(hidden_states, params, *, eps=1e-5,
                        compute_dtype=jnp.bfloat16, tm=None, tn=512,
                        single_buffer_constants=True):
    """hidden_states: (B, S, H) -> logits (B, S, C)."""
    B, S, H = hidden_states.shape
    C = params["decoder_w"].shape[1]
    N = B * S
    out_dtype = hidden_states.dtype

    dense_w = params["dense_w"].astype(compute_dtype)    # (H, H)
    decoder_w = params["decoder_w"].astype(compute_dtype)  # (H, C)

    act_bytes = jnp.dtype(compute_dtype).itemsize
    out_bytes = jnp.dtype(out_dtype).itemsize
    row_align = 16 if act_bytes < 4 else 8

    # ---- codebook (output) tile ------------------------------------------
    if C <= tn:
        tn = C                      # full extent -> satisfies (8,128) rule
        c_pad = C
    else:
        tn = max(128, (tn // 128) * 128)
        c_pad = _round_up(C, tn)

    # ---- row tile (generation-aware) --------------------------------------
    vmem_cap = _vmem_capacity_bytes()
    vmem_ceiling = max(int(vmem_cap * 0.75), 12 * 2 ** 20)  # leave Mosaic headroom

    # Roofline-driven max row tile with bf16 operands: ~1024 rows clears the
    # v6e HBM knee; 64-MiB parts (v7x) need less and have less VMEM.
    tm_max = 1024 if vmem_cap >= 100 * 2 ** 20 else 512
    if tm is not None:
        tm_max = _round_up(max(int(tm), row_align), row_align)
    tm_max = min(tm_max, _round_up(N, row_align))

    # Size the tile so the last one is (nearly) full -> no pathological padding.
    n_tiles = _cdiv(N, tm_max)
    if vmem_cap < 100 * 2 ** 20 and N >= 2 * row_align:
        n_tiles = max(n_tiles, 2)   # v7x-class: keep both TensorCores busy
    tm_ = _round_up(_cdiv(N, n_tiles), row_align)

    def working_set(t):
        return (2 * t * H * act_bytes                               # x (dbl buf)
                + (1 if single_buffer_constants else 2) * H * H * act_bytes
                + 2 * 3 * H * 4                                     # b1/gamma/beta
                + 2 * (H * tn * act_bytes + tn * 4)                 # W2 tile + b2
                + 2 * t * tn * out_bytes                            # out tile
                + t * H * act_bytes                                 # h scratch
                + t * H * 4)                                        # f32 temps

    while working_set(tm_) > vmem_ceiling and tm_ > row_align:
        tm_ = _round_up(max(tm_ // 2, row_align), row_align)
    tm = tm_
    n_pad = _round_up(N, tm)
    n_row_tiles = n_pad // tm

    # ---- pad / reshape inputs ---------------------------------------------
    x2d = hidden_states.reshape(N, H).astype(compute_dtype)
    if n_pad != N:
        x2d = jnp.pad(x2d, ((0, n_pad - N), (0, 0)))

    b1 = params["dense_b"].reshape(1, H)
    g = params["ln_gamma"].reshape(1, H)
    beta = params["ln_beta"].reshape(1, H)
    b2 = params["decoder_b"].reshape(1, C)
    w2 = decoder_w
    if c_pad != C:
        w2 = jnp.pad(w2, ((0, 0), (0, c_pad - C)))
        b2 = jnp.pad(b2, ((0, 0), (0, c_pad - C)))

    # ---- compiler hints -----------------------------------------------------
    vmem_limit = int(min(vmem_ceiling, max(2 * working_set(tm), 32 * 2 ** 20)))

    cost = pl.CostEstimate(
        flops=2 * n_pad * H * (H + c_pad),
        transcendentals=n_pad * H,                        # erf
        bytes_accessed=(n_pad * H * act_bytes             # x
                        + H * H * act_bytes               # W1 (fetched once)
                        + n_row_tiles * H * c_pad * act_bytes  # W2 re-streamed
                        + n_pad * c_pad * out_bytes       # output
                        + (3 * H + c_pad) * 4),           # biases / LN params
    )

    kernel = functools.partial(_mim_head_kernel, eps=eps)
    grid = (n_row_tiles, c_pad // tn)

    def _const_spec(shape, single_buffer):
        idx = lambda i, j: (0,) * len(shape)
        if single_buffer:
            try:
                # Constant index_map -> never re-DMA'd; one buffer is enough.
                return pl.BlockSpec(shape, idx, pipeline_mode=pl.Buffered(1))
            except (AttributeError, TypeError):
                pass
        return pl.BlockSpec(shape, idx)

    def _call(single_buffer):
        return pl.pallas_call(
            kernel,
            out_shape=jax.ShapeDtypeStruct((n_pad, c_pad), out_dtype),
            grid_spec=pltpu.PrefetchScalarGridSpec(
                num_scalar_prefetch=0,
                grid=grid,
                in_specs=[
                    pl.BlockSpec((tm, H), lambda i, j: (i, 0)),   # x rows
                    _const_spec((H, H), single_buffer),           # dense weight
                    _const_spec((1, H), single_buffer),           # dense bias
                    _const_spec((1, H), single_buffer),           # LN gamma
                    _const_spec((1, H), single_buffer),           # LN beta
                    pl.BlockSpec((H, tn), lambda i, j: (0, j)),   # decoder W tile
                    pl.BlockSpec((1, tn), lambda i, j: (0, j)),   # decoder b tile
                ],
                out_specs=pl.BlockSpec((tm, tn), lambda i, j: (i, j)),
                scratch_shapes=[pltpu.VMEM((tm, H), compute_dtype)],
            ),
            compiler_params=pltpu.CompilerParams(
                dimension_semantics=("parallel", "arbitrary"),
                vmem_limit_bytes=vmem_limit,
            ),
            cost_estimate=cost,
        )(x2d, dense_w, b1, g, beta, w2, b2)

    if single_buffer_constants:
        try:
            out = _call(True)
        except Exception:
            # Some JAX versions reject Buffered(1); fall back to default buffering.
            out = _call(False)
    else:
        out = _call(False)

    return out[:N, :C].reshape(B, S, C)


def init_params(key, hidden_size, codebook_size, dtype=jnp.float32):
    k1, k2, k3 = jax.random.split(key, 3)
    # PyTorch nn.Linear stores weight as (out, in); we transpose to (in, out)
    # so the kernel computes x @ W directly (same math as x @ W_pt.T).
    dense_w_pt = jax.random.normal(k1, (hidden_size, hidden_size), dtype) * 0.02
    decoder_w_pt = jax.random.normal(k2, (codebook_size, hidden_size), dtype) * 0.02
    dense_b = jax.random.normal(k3, (hidden_size,), dtype) * 0.02
    return {
        "dense_w": dense_w_pt.T,
        "dense_b": dense_b,
        "ln_gamma": jnp.ones((hidden_size,), dtype),
        "ln_beta": jnp.zeros((hidden_size,), dtype),
        "decoder_w": decoder_w_pt.T,
        "decoder_b": jnp.zeros((codebook_size,), dtype),  # self.bias init = zeros
    }


def reference(hidden_states, params, eps=1e-5):
    h = hidden_states @ params["dense_w"] + params["dense_b"]
    h = jax.nn.gelu(h, approximate=False)
    mean = jnp.mean(h, axis=-1, keepdims=True)
    var = jnp.mean(jnp.square(h - mean), axis=-1, keepdims=True)
    h = (h - mean) * jax.lax.rsqrt(var + eps)
    h = h * params["ln_gamma"] + params["ln_beta"]
    return h @ params["decoder_w"] + params["decoder_b"]


if __name__ == "__main__":
    key = jax.random.PRNGKey(0)

    # Test 1: small shapes consistent with the module (B=2, S=8, H=32, C=64).
    B, S, H, CODEBOOK = 2, 8, 32, 64
    kx, kp, key = jax.random.split(key, 3)
    x = jax.random.normal(kx, (B, S, H), jnp.float32)
    params = init_params(kp, H, CODEBOOK)
    ref = reference(x, params)

    # 1a: exact-semantics check with f32 MXU operands (tight tolerance).
    out_f32 = jax.block_until_ready(
        mim_prediction_head(x, params, compute_dtype=jnp.float32))
    assert out_f32.shape == (B, S, CODEBOOK)
    assert jnp.allclose(out_f32, ref, atol=1e-4, rtol=1e-4), "mismatch (test 1, f32)"

    # 1b: performance path with bf16 MXU operands (relaxed tolerance).
    out_bf16 = jax.block_until_ready(mim_prediction_head(x, params))
    assert out_bf16.shape == (B, S, CODEBOOK)
    assert jnp.allclose(out_bf16, ref, atol=5e-2, rtol=5e-2), "mismatch (test 1, bf16)"

    # Test 2: exercises row padding (N=14) and C tiling / scratch reuse
    # (C=256 split into two TN=128 tiles).
    B2, S2, H2, C2 = 2, 7, 32, 256
    kx2, kp2 = jax.random.split(key)
    x2 = jax.random.normal(kx2, (B2, S2, H2), jnp.float32)
    params2 = init_params(kp2, H2, C2)
    ref2 = reference(x2, params2)

    out2 = jax.block_until_ready(mim_prediction_head(x2, params2, tn=128))
    assert out2.shape == (B2, S2, C2)
    assert jnp.allclose(out2, ref2, atol=5e-2, rtol=5e-2), "mismatch (test 2, bf16)"

    out2_f32 = jax.block_until_ready(
        mim_prediction_head(x2, params2, tn=128, compute_dtype=jnp.float32))
    assert jnp.allclose(out2_f32, ref2, atol=1e-4, rtol=1e-4), "mismatch (test 2, f32)"

    print("KERNEL_OK")
</pallas_src>

<mosaic_0001>
module attributes {stable_mosaic.version = 11 : i64} {
  func.func @_mim_head_kernel(%arg0: i32, %arg1: i32, %arg2: memref<8x32xf32, #tpu.memory_space<vmem>>, %arg3: memref<32x32xf32, #tpu.memory_space<vmem>>, %arg4: memref<1x32xf32, #tpu.memory_space<vmem>>, %arg5: memref<1x32xf32, #tpu.memory_space<vmem>>, %arg6: memref<1x32xf32, #tpu.memory_space<vmem>>, %arg7: memref<32x64xf32, #tpu.memory_space<vmem>>, %arg8: memref<1x64xf32, #tpu.memory_space<vmem>>, %arg9: memref<8x64xf32, #tpu.memory_space<vmem>>, %arg10: memref<8x32xf32, #tpu.memory_space<vmem>>) attributes {dimension_semantics = [#tpu.dimension_semantics<parallel>, #tpu.dimension_semantics<arbitrary>], iteration_bounds = array<i64: 2, 1>, scalar_prefetch = 0 : i64, scratch_operands = 1 : i64, tpu.core_type = #tpu.core_type<tc>, window_params = [{transform_indices = @transform_0, window_bounds = array<i64: 8, 32>}, {pipeline_mode = #tpu.pipeline_mode<synchronous>, transform_indices = @transform_1, window_bounds = array<i64: 32, 32>}, {pipeline_mode = #tpu.pipeline_mode<synchronous>, transform_indices = @transform_2, window_bounds = array<i64: 1, 32>}, {pipeline_mode = #tpu.pipeline_mode<synchronous>, transform_indices = @transform_3, window_bounds = array<i64: 1, 32>}, {pipeline_mode = #tpu.pipeline_mode<synchronous>, transform_indices = @transform_4, window_bounds = array<i64: 1, 32>}, {transform_indices = @transform_5, window_bounds = array<i64: 32, 64>}, {transform_indices = @transform_6, window_bounds = array<i64: 1, 64>}, {transform_indices = @transform_7, window_bounds = array<i64: 8, 64>}]} {
    %c0_i32 = arith.constant 0 : i32
    %0 = arith.cmpi eq, %arg1, %c0_i32 : i32
    %1 = arith.extui %0 : i1 to i32
    %c0_i32_0 = arith.constant 0 : i32
    %2 = arith.cmpi ne, %1, %c0_i32_0 : i32
    scf.if %2 {
      %c0_8 = arith.constant 0 : index
      %c0_9 = arith.constant 0 : index
      %10 = vector.load %arg2[%c0_8, %c0_9] : memref<8x32xf32, #tpu.memory_space<vmem>>, vector<8x32xf32>
      %c0_10 = arith.constant 0 : index
      %c0_11 = arith.constant 0 : index
      %11 = vector.load %arg3[%c0_10, %c0_11] : memref<32x32xf32, #tpu.memory_space<vmem>>, vector<32x32xf32>
      %cst_12 = arith.constant dense<0.000000e+00> : vector<8x32xf32>
      %12 = tpu.matmul %10, %11, %cst_12 {dimension_numbers = #tpu.dot_dimension_numbers<[1], [0], [0], [1], [0, 0, 1, 1], [], []>} : vector<8x32xf32>, vector<32x32xf32>, vector<8x32xf32> -> vector<8x32xf32>
      %c0_13 = arith.constant 0 : index
      %c0_14 = arith.constant 0 : index
      %13 = vector.load %arg4[%c0_13, %c0_14] : memref<1x32xf32, #tpu.memory_space<vmem>>, vector<1x32xf32>
      %14 = vector.broadcast %13 : vector<1x32xf32> to vector<8x32xf32>
      %15 = arith.addf %12, %14 : vector<8x32xf32>
      %cst_15 = arith.constant 5.000000e-01 : f32
      %16 = vector.broadcast %cst_15 : f32 to vector<8x32xf32>
      %17 = arith.mulf %16, %15 : vector<8x32xf32>
      %cst_16 = arith.constant 0.707106769 : f32
      %18 = vector.broadcast %cst_16 : f32 to vector<8x32xf32>
      %19 = arith.mulf %15, %18 : vector<8x32xf32>
      %20 = math.erf %19 : vector<8x32xf32>
      %cst_17 = arith.constant 1.000000e+00 : f32
      %21 = vector.broadcast %cst_17 : f32 to vector<8x32xf32>
      %22 = arith.addf %21, %20 : vector<8x32xf32>
      %23 = arith.mulf %17, %22 : vector<8x32xf32>
      %cst_18 = arith.constant dense<0.000000e+00> : vector<8xf32>
      %24 = vector.multi_reduction <add>, %23, %cst_18 [1] : vector<8x32xf32> to vector<8xf32>
      %25 = vector.shape_cast %24 : vector<8xf32> to vector<8x1xf32>
      %cst_19 = arith.constant 3.200000e+01 : f32
      %26 = vector.broadcast %cst_19 : f32 to vector<8x1xf32>
      %27 = arith.divf %25, %26 : vector<8x1xf32>
      %28 = vector.broadcast %27 : vector<8x1xf32> to vector<8x32xf32>
      %29 = arith.subf %23, %28 : vector<8x32xf32>
      %30 = arith.mulf %29, %29 : vector<8x32xf32>
      %cst_20 = arith.constant dense<0.000000e+00> : vector<8xf32>
      %31 = vector.multi_reduction <add>, %30, %cst_20 [1] : vector<8x32xf32> to vector<8xf32>
      %32 = vector.shape_cast %31 : vector<8xf32> to vector<8x1xf32>
      %cst_21 = arith.constant 3.200000e+01 : f32
      %33 = vector.broadcast %cst_21 : f32 to vector<8x1xf32>
      %34 = arith.divf %32, %33 : vector<8x1xf32>
      %35 = vector.broadcast %27 : vector<8x1xf32> to vector<8x32xf32>
      %36 = arith.subf %23, %35 : vector<8x32xf32>
      %cst_22 = arith.constant 9.99999974E-6 : f32
      %37 = vector.broadcast %cst_22 : f32 to vector<8x1xf32>
      %38 = arith.addf %34, %37 : vector<8x1xf32>
      %39 = math.rsqrt %38 : vector<8x1xf32>
      %40 = vector.broadcast %39 : vector<8x1xf32> to vector<8x32xf32>
      %41 = arith.mulf %36, %40 : vector<8x32xf32>
      %c0_23 = arith.constant 0 : index
      %c0_24 = arith.constant 0 : index
      %42 = vector.load %arg5[%c0_23, %c0_24] : memref<1x32xf32, #tpu.memory_space<vmem>>, vector<1x32xf32>
      %43 = vector.broadcast %42 : vector<1x32xf32> to vector<8x32xf32>
      %44 = arith.mulf %41, %43 : vector<8x32xf32>
      %c0_25 = arith.constant 0 : index
      %c0_26 = arith.constant 0 : index
      %45 = vector.load %arg6[%c0_25, %c0_26] : memref<1x32xf32, #tpu.memory_space<vmem>>, vector<1x32xf32>
      %46 = vector.broadcast %45 : vector<1x32xf32> to vector<8x32xf32>
      %47 = arith.addf %44, %46 : vector<8x32xf32>
      %c0_27 = arith.constant 0 : index
      %c0_28 = arith.constant 0 : index
      %48 = vector.load %arg10[%c0_27, %c0_28] : memref<8x32xf32, #tpu.memory_space<vmem>>, vector<8x32xf32>
      tpu.vector_store %arg10[%c0_27, %c0_28], %47 {strides = array<i32>} : memref<8x32xf32, #tpu.memory_space<vmem>>, vector<8x32xf32>,
    } else {
    }
    %c0 = arith.constant 0 : index
    %c0_1 = arith.constant 0 : index
    %3 = vector.load %arg10[%c0, %c0_1] : memref<8x32xf32, #tpu.memory_space<vmem>>, vector<8x32xf32>
    %c0_2 = arith.constant 0 : index
    %c0_3 = arith.constant 0 : index
    %4 = vector.load %arg7[%c0_2, %c0_3] : memref<32x64xf32, #tpu.memory_space<vmem>>, vector<32x64xf32>
    %cst = arith.constant dense<0.000000e+00> : vector<8x64xf32>
    %5 = tpu.matmul %3, %4, %cst {dimension_numbers = #tpu.dot_dimension_numbers<[1], [0], [0], [1], [0, 0, 1, 1], [], []>} : vector<8x32xf32>, vector<32x64xf32>, vector<8x64xf32> -> vector<8x64xf32>
    %c0_4 = arith.constant 0 : index
    %c0_5 = arith.constant 0 : index
    %6 = vector.load %arg8[%c0_4, %c0_5] : memref<1x64xf32, #tpu.memory_space<vmem>>, vector<1x64xf32>
    %7 = vector.broadcast %6 : vector<1x64xf32> to vector<8x64xf32>
    %8 = arith.addf %5, %7 : vector<8x64xf32>
    %c0_6 = arith.constant 0 : index
    %c0_7 = arith.constant 0 : index
    %9 = vector.load %arg9[%c0_6, %c0_7] : memref<8x64xf32, #tpu.memory_space<vmem>>, vector<8x64xf32>
    tpu.vector_store %arg9[%c0_6, %c0_7], %8 {strides = array<i32>} : memref<8x64xf32, #tpu.memory_space<vmem>>, vector<8x64xf32>,
    return
  }
  func.func @transform_0(%arg0: i32, %arg1: i32) -> (i32, i32) {
    %c0_i32 = arith.constant 0 : i32
    %c0_i32_0 = arith.constant 0 : i32
    return %arg0, %c0_i32 : i32, i32
  }
  func.func @transform_1(%arg0: i32, %arg1: i32) -> (i32, i32) {
    %c0_i32 = arith.constant 0 : i32
    %c0_i32_0 = arith.constant 0 : i32
    %c0_i32_1 = arith.constant 0 : i32
    return %c0_i32, %c0_i32_0 : i32, i32
  }
  func.func @transform_2(%arg0: i32, %arg1: i32) -> (i32, i32) {
    %c0_i32 = arith.constant 0 : i32
    %c0_i32_0 = arith.constant 0 : i32
    %c0_i32_1 = arith.constant 0 : i32
    return %c0_i32, %c0_i32_0 : i32, i32
  }
  func.func @transform_3(%arg0: i32, %arg1: i32) -> (i32, i32) {
    %c0_i32 = arith.constant 0 : i32
    %c0_i32_0 = arith.constant 0 : i32
    %c0_i32_1 = arith.constant 0 : i32
    return %c0_i32, %c0_i32_0 : i32, i32
  }
  func.func @transform_4(%arg0: i32, %arg1: i32) -> (i32, i32) {
    %c0_i32 = arith.constant 0 : i32
    %c0_i32_0 = arith.constant 0 : i32
    %c0_i32_1 = arith.constant 0 : i32
    return %c0_i32, %c0_i32_0 : i32, i32
  }
  func.func @transform_5(%arg0: i32, %arg1: i32) -> (i32, i32) {
    %c0_i32 = arith.constant 0 : i32
    %c0_i32_0 = arith.constant 0 : i32
    return %c0_i32, %arg1 : i32, i32
  }
  func.func @transform_6(%arg0: i32, %arg1: i32) -> (i32, i32) {
    %c0_i32 = arith.constant 0 : i32
    %c0_i32_0 = arith.constant 0 : i32
    return %c0_i32, %arg1 : i32, i32
  }
  func.func @transform_7(%arg0: i32, %arg1: i32) -> (i32, i32) {
    %c0_i32 = arith.constant 0 : i32
    return %arg0, %arg1 : i32, i32
  }
}

module attributes {stable_mosaic.version = 11 : i64} {
  func.func @_mim_head_kernel(%arg0: i32, %arg1: i32, %arg2: memref<8x32xf32, #tpu.memory_space<vmem>>, %arg3: memref<32x32xf32, #tpu.memory_space<vmem>>, %arg4: memref<1x32xf32, #tpu.memory_space<vmem>>, %arg5: memref<1x32xf32, #tpu.memory_space<vmem>>, %arg6: memref<1x32xf32, #tpu.memory_space<vmem>>, %arg7: memref<32x64xf32, #tpu.memory_space<vmem>>, %arg8: memref<1x64xf32, #tpu.memory_space<vmem>>, %arg9: memref<8x64xf32, #tpu.memory_space<vmem>>, %arg10: memref<8x32xf32, #tpu.memory_space<vmem>>) attributes {dimension_semantics = [#tpu.dimension_semantics<parallel>, #tpu.dimension_semantics<arbitrary>], iteration_bounds = array<i64: 2, 1>, scalar_prefetch = 0 : i64, scratch_operands = 1 : i64, tpu.core_type = #tpu.core_type<tc>, window_params = [{transform_indices = @transform_0, window_bounds = array<i64: 8, 32>}, {pipeline_mode = #tpu.pipeline_mode<synchronous>, transform_indices = @transform_1, window_bounds = array<i64: 32, 32>}, {pipeline_mode = #tpu.pipeline_mode<synchronous>, transform_indices = @transform_2, window_bounds = array<i64: 1, 32>}, {pipeline_mode = #tpu.pipeline_mode<synchronous>, transform_indices = @transform_3, window_bounds = array<i64: 1, 32>}, {pipeline_mode = #tpu.pipeline_mode<synchronous>, transform_indices = @transform_4, window_bounds = array<i64: 1, 32>}, {transform_indices = @transform_5, window_bounds = array<i64: 32, 64>}, {transform_indices = @transform_6, window_bounds = array<i64: 1, 64>}, {transform_indices = @transform_7, window_bounds = array<i64: 8, 64>}]} {
    %c0_i32 = arith.constant 0 : i32
    %0 = arith.cmpi eq, %arg1, %c0_i32 : i32
    %1 = arith.extui %0 : i1 to i32
    %c0_i32_0 = arith.constant 0 : i32
    %2 = arith.cmpi ne, %1, %c0_i32_0 : i32
    scf.if %2 {
      %c0_8 = arith.constant 0 : index
      %c0_9 = arith.constant 0 : index
      %10 = vector.load %arg2[%c0_8, %c0_9] : memref<8x32xf32, #tpu.memory_space<vmem>>, vector<8x32xf32>
      %c0_10 = arith.constant 0 : index
      %c0_11 = arith.constant 0 : index
      %11 = vector.load %arg3[%c0_10, %c0_11] : memref<32x32xf32, #tpu.memory_space<vmem>>, vector<32x32xf32>
      %cst_12 = arith.constant dense<0.000000e+00> : vector<8x32xf32>
      %12 = tpu.matmul %10, %11, %cst_12 {dimension_numbers = #tpu.dot_dimension_numbers<[1], [0], [0], [1], [0, 0, 1, 1], [], []>} : vector<8x32xf32>, vector<32x32xf32>, vector<8x32xf32> -> vector<8x32xf32>
      %c0_13 = arith.constant 0 : index
      %c0_14 = arith.constant 0 : index
      %13 = vector.load %arg4[%c0_13, %c0_14] : memref<1x32xf32, #tpu.memory_space<vmem>>, vector<1x32xf32>
      %14 = vector.broadcast %13 : vector<1x32xf32> to vector<8x32xf32>
      %15 = arith.addf %12, %14 : vector<8x32xf32>
      %cst_15 = arith.constant 5.000000e-01 : f32
      %16 = vector.broadcast %cst_15 : f32 to vector<8x32xf32>
      %17 = arith.mulf %16, %15 : vector<8x32xf32>
      %cst_16 = arith.constant 0.707106769 : f32
      %18 = vector.broadcast %cst_16 : f32 to vector<8x32xf32>
      %19 = arith.mulf %15, %18 : vector<8x32xf32>
      %20 = math.erf %19 : vector<8x32xf32>
      %cst_17 = arith.constant 1.000000e+00 : f32
      %21 = vector.broadcast %cst_17 : f32 to vector<8x32xf32>
      %22 = arith.addf %21, %20 : vector<8x32xf32>
      %23 = arith.mulf %17, %22 : vector<8x32xf32>
      %cst_18 = arith.constant dense<0.000000e+00> : vector<8xf32>
      %24 = vector.multi_reduction <add>, %23, %cst_18 [1] : vector<8x32xf32> to vector<8xf32>
      %25 = vector.shape_cast %24 : vector<8xf32> to vector<8x1xf32>
      %cst_19 = arith.constant 3.200000e+01 : f32
      %26 = vector.broadcast %cst_19 : f32 to vector<8x1xf32>
      %27 = arith.divf %25, %26 : vector<8x1xf32>
      %28 = vector.broadcast %27 : vector<8x1xf32> to vector<8x32xf32>
      %29 = arith.subf %23, %28 : vector<8x32xf32>
      %30 = arith.mulf %29, %29 : vector<8x32xf32>
      %cst_20 = arith.constant dense<0.000000e+00> : vector<8xf32>
      %31 = vector.multi_reduction <add>, %30, %cst_20 [1] : vector<8x32xf32> to vector<8xf32>
      %32 = vector.shape_cast %31 : vector<8xf32> to vector<8x1xf32>
      %cst_21 = arith.constant 3.200000e+01 : f32
      %33 = vector.broadcast %cst_21 : f32 to vector<8x1xf32>
      %34 = arith.divf %32, %33 : vector<8x1xf32>
      %35 = vector.broadcast %27 : vector<8x1xf32> to vector<8x32xf32>
      %36 = arith.subf %23, %35 : vector<8x32xf32>
      %cst_22 = arith.constant 9.99999974E-6 : f32
      %37 = vector.broadcast %cst_22 : f32 to vector<8x1xf32>
      %38 = arith.addf %34, %37 : vector<8x1xf32>
      %39 = math.rsqrt %38 : vector<8x1xf32>
      %40 = vector.broadcast %39 : vector<8x1xf32> to vector<8x32xf32>
      %41 = arith.mulf %36, %40 : vector<8x32xf32>
      %c0_23 = arith.constant 0 : index
      %c0_24 = arith.constant 0 : index
      %42 = vector.load %arg5[%c0_23, %c0_24] : memref<1x32xf32, #tpu.memory_space<vmem>>, vector<1x32xf32>
      %43 = vector.broadcast %42 : vector<1x32xf32> to vector<8x32xf32>
      %44 = arith.mulf %41, %43 : vector<8x32xf32>
      %c0_25 = arith.constant 0 : index
      %c0_26 = arith.constant 0 : index
      %45 = vector.load %arg6[%c0_25, %c0_26] : memref<1x32xf32, #tpu.memory_space<vmem>>, vector<1x32xf32>
      %46 = vector.broadcast %45 : vector<1x32xf32> to vector<8x32xf32>
      %47 = arith.addf %44, %46 : vector<8x32xf32>
      %c0_27 = arith.constant 0 : index
      %c0_28 = arith.constant 0 : index
      %48 = vector.load %arg10[%c0_27, %c0_28] : memref<8x32xf32, #tpu.memory_space<vmem>>, vector<8x32xf32>
      tpu.vector_store %arg10[%c0_27, %c0_28], %47 {strides = array<i32>} : memref<8x32xf32, #tpu.memory_space<vmem>>, vector<8x32xf32>,
    } else {
    }
    %c0 = arith.constant 0 : index
    %c0_1 = arith.constant 0 : index
    %3 = vector.load %arg10[%c0, %c0_1] : memref<8x32xf32, #tpu.memory_space<vmem>>, vector<8x32xf32>
    %c0_2 = arith.constant 0 : index
    %c0_3 = arith.constant 0 : index
    %4 = vector.load %arg7[%c0_2, %c0_3] : memref<32x64xf32, #tpu.memory_space<vmem>>, vector<32x64xf32>
    %cst = arith.constant dense<0.000000e+00> : vector<8x64xf32>
    %5 = tpu.matmul %3, %4, %cst {dimension_numbers = #tpu.dot_dimension_numbers<[1], [0], [0], [1], [0, 0, 1, 1], [], []>} : vector<8x32xf32>, vector<32x64xf32>, vector<8x64xf32> -> vector<8x64xf32>
    %c0_4 = arith.constant 0 : index
    %c0_5 = arith.constant 0 : index
    %6 = vector.load %arg8[%c0_4, %c0_5] : memref<1x64xf32, #tpu.memory_space<vmem>>, vector<1x64xf32>
    %7 = vector.broadcast %6 : vector<1x64xf32> to vector<8x64xf32>
    %8 = arith.addf %5, %7 : vector<8x64xf32>
    %c0_6 = arith.constant 0 : index
    %c0_7 = arith.constant 0 : index
    %9 = vector.load %arg9[%c0_6, %c0_7] : memref<8x64xf32, #tpu.memory_space<vmem>>, vector<8x64xf32>
    tpu.vector_store %arg9[%c0_6, %c0_7], %8 {strides = array<i32>} : memref<8x64xf32, #tpu.memory_space<vmem>>, vector<8x64xf32>,
    return
  }
  func.func @transform_0(%arg0: i32, %arg1: i32) -> (i32, i32) {
    %c0_i32 = arith.constant 0 : i32
    %c0_i32_0 = arith.constant 0 : i32
    return %arg0, %c0_i32 : i32, i32
  }
  func.func @transform_1(%arg0: i32, %arg1: i32) -> (i32, i32) {
    %c0_i32 = arith.constant 0 : i32
    %c0_i32_0 = arith.constant 0 : i32
    %c0_i32_1 = arith.constant 0 : i32
    return %c0_i32, %c0_i32_0 : i32, i32
  }
  func.func @transform_2(%arg0: i32, %arg1: i32) -> (i32, i32) {
    %c0_i32 = arith.constant 0 : i32
    %c0_i32_0 = arith.constant 0 : i32
    %c0_i32_1 = arith.constant 0 : i32
    return %c0_i32, %c0_i32_0 : i32, i32
  }
  func.func @transform_3(%arg0: i32, %arg1: i32) -> (i32, i32) {
    %c0_i32 = arith.constant 0 : i32
    %c0_i32_0 = arith.constant 0 : i32
    %c0_i32_1 = arith.constant 0 : i32
    return %c0_i32, %c0_i32_0 : i32, i32
  }
  func.func @transform_4(%arg0: i32, %arg1: i32) -> (i32, i32) {
    %c0_i32 = arith.constant 0 : i32
    %c0_i32_0 = arith.constant 0 : i32
    %c0_i32_1 = arith.constant 0 : i32
    return %c0_i32, %c0_i32_0 : i32, i32
  }
  func.func @transform_5(%arg0: i32, %arg1: i32) -> (i32, i32) {
    %c0_i32 = arith.constant 0 : i32
    %c0_i32_0 = arith.constant 0 : i32
    return %c0_i32, %arg1 : i32, i32
  }
  func.func @transform_6(%arg0: i32, %arg1: i32) -> (i32, i32) {
    %c0_i32 = arith.constant 0 : i32
    %c0_i32_0 = arith.constant 0 : i32
    return %c0_i32, %arg1 : i32, i32
  }
  func.func @transform_7(%arg0: i32, %arg1: i32) -> (i32, i32) {
    %c0_i32 = arith.constant 0 : i32
    return %arg0, %arg1 : i32, i32
  }
}

</mosaic_0001>

<llo_original>
// kernel: tpu_custom_call.1
$region0: #{tpu_custom_call.1}
  #allocation0 [shape = 'u32[]', space=smem, size = 0x4, offset = 0x4, fixed_abs, tag = 'smem constant byte address 0x4 - core index']
  #allocation1 [shape = 'u32[144,128]{1,0:T(1,128)}', space=vmem, size = 0x12000, scoped, tag = 'internal scratch']
  #allocation2 [shape = 'f32[8,32]{1,0:T(8,128)}', space=vmem, size = 0x1000, scoped, tag = 'scratch operand']
  %s0 = inlined_call_operand.hbm [shape: f32[16,32], index: 0, kind: input, shape index: {}]
  %s1 = inlined_call_operand.hbm [shape: f32[32,32], index: 1, kind: input, shape index: {}]
  %s2 = inlined_call_operand.vmem [shape: f32[1,32], index: 2, kind: input, shape index: {}]
  %s3 = inlined_call_operand.vmem [shape: f32[1,32], index: 3, kind: input, shape index: {}]
  %s4 = inlined_call_operand.vmem [shape: f32[1,32], index: 4, kind: input, shape index: {}]
  %s5 = inlined_call_operand.hbm [shape: f32[32,64], index: 5, kind: input, shape index: {}]
  %s6 = inlined_call_operand.vmem [shape: f32[1,64], index: 6, kind: input, shape index: {}]
  %s7 = inlined_call_operand.hbm [shape: f32[16,64], index: 7, kind: output, shape index: {}]
  %s8 = sld [smem:[#allocation0]]
  $region77: #{tpu_custom_call.1} parent=0
    _
  %s10 = ssub.s32 1, %s8
  %s11 = scalar_select 0, %s10, %s8
  $region1: #{tpu_custom_call.1} parent=0
    #allocation3 [shape = 'u8[8192]{0}', space=vmem, size = 0x2000, scoped, tag = 'input window, operand 0']
    #allocation4 [shape = 's32[2]{0}', space=sflag, size = 0x8, scoped, tag = 'scoped memory for tpu_custom_call.1']
    #allocation5 [shape = 's32[2]{0}', space=sflag, size = 0x8, scoped, tag = 'scoped memory for tpu_custom_call.1']
    #allocation6 [shape = 'u8[16384]{0}', space=vmem, size = 0x4000, scoped, tag = 'input window, operand 1, single buffered']
    #allocation7 [shape = 's32[1]{0}', space=sflag, size = 0x4, scoped, tag = 'scoped memory for tpu_custom_call.1']
    #allocation8 [shape = 'u8[16384]{0}', space=vmem, size = 0x4000, scoped, tag = 'input window, operand 5, single buffered']
    #allocation9 [shape = 'u8[8192]{0}', space=vmem, size = 0x2000, scoped, tag = 'output window, operand 0']
    %12 = vsyncpa [#allocation4], 0
    %s13 = scalar_lea.sflag [#allocation4], 1
    %14 = vsyncpa %s13, 0
    %15 = vsyncpa [#allocation7], 0
    %16 = vsyncpa [#allocation5], 0
    %s17 = scalar_lea.sflag [#allocation5], 1
    %18 = vsyncpa %s17, 0
    loop: start=0, step=1, limit=4
    $region2: #{tpu_custom_call.1} parent=1 // loop_pre_header
      _
    $region3: #{tpu_custom_call.1} parent=1 // loop_header
      %s20 = sphi 0, %s24
      %p21 = scmp.ge.s32.totalorder %s20, 4
      %s27 = sphi 0, %s39
      %s28 = sphi 0, %s35
      %s29 = sphi 0, %s27
      %s30 = sphi 0, %s28
      %s31 = sphi 0, %s29
      %s32 = sphi 0, %s30
      %s42 = sphi 0, %s44
      %s45 = sphi 0, %s42
      %s46 = sphi 0, %s45
      %s62 = sphi 0, %s46
      %s66 = sphi 0, %s66
      %s68 = sphi 0, %s66
      %s69 = sphi 0, %s68
      %s83 = sphi 0, %s69
      %s87 = sphi 0, %s87
      %s89 = sphi 0, %s87
      %s90 = sphi 0, %s89
      %s104 = sphi 0, %s90
      %s108 = sphi 0, %s108
      %s110 = sphi 0, %s108
      %s111 = sphi 0, %s110
      %s125 = sphi 0, %s111
      %s129 = sphi 0, %s129
      %s131 = sphi 0, %s129
      %s132 = sphi 0, %s131
      %s146 = sphi 0, %s132
      %s152 = sphi 0, %s154
      %s155 = sphi 0, %s152
      %s156 = sphi 0, %s155
      %s172 = sphi 0, %s156
      %s178 = sphi 0, %s180
      %s181 = sphi 0, %s178
      %s182 = sphi 0, %s181
      %s198 = sphi 0, %s182
      %s206 = sphi 0, %s208
      %s209 = sphi 0, %s206
      %s210 = sphi 0, %s209
      %s226 = sphi 0, %s210
    $region4: #{tpu_custom_call.1} parent=1 // loop_header_branch
      %23 = sbr.rel (%p21) target = $region8
    $region5: #{tpu_custom_call.1} parent=1 // loop_body
      %s25 = ssub.s32 %s20, 1
      %s26 = ssub.s32 %s20, 2
      %s33 = sadd.s32 1, %s28
      %p34 = scmp.ge.s32.totalorder %s33, 1
      %s35 = scalar_select %p34, 0, %s33
      %s36 = sadd.s32 1, %s27
      %s37 = scalar_select %p34, %s36, %s27
      %p38 = scmp.ge.s32.totalorder %s37, 2
      %s39 = scalar_select %p38, 0, %s37
      %s40 = ssub.s32 %s27, %s39
      %p41 = scmp.eq.s32.totalorder %s40, 0
      %s43 = sadd.s32 %s42, 1
      %s44 = scalar_select %p41, %s42, %s43
      %p47 = pneg %p41
      %p48 = scmp.eq.s32.totalorder %s20, 1
      %p49 = por %p47, %p48
      %p50 = scmp.ne.s32.totalorder %s42, %s45
      %p51 = scmp.eq.s32.totalorder %s20, 0
      %p52 = por %p50, %p51
      %p53 = scmp.ne.s32.totalorder %s42, %s45
      %p54 = scmp.eq.s32.totalorder %s25, 1
      %p55 = por %p53, %p54
      %p56 = scmp.ne.s32.totalorder %s45, %s46
      %p57 = scmp.eq.s32.totalorder %s25, 0
      %p58 = por %p56, %p57
      %p59 = scmp.ne.s32.totalorder %s45, %s46
      %p60 = scmp.eq.s32.totalorder %s26, 1
      %p61 = por %p59, %p60
      %p63 = scmp.ne.s32.totalorder %s46, %s62
      %p64 = scmp.eq.s32.totalorder %s26, 0
      %p65 = por %p63, %p64
      %s67 = sadd.s32 %s66, 1
      %p70 = scmp.eq.s32.totalorder %s20, 1
      %p71 = scmp.ne.s32.totalorder %s66, %s68
      %p72 = scmp.eq.s32.totalorder %s20, 0
      %p73 = por %p71, %p72
      %p74 = scmp.ne.s32.totalorder %s66, %s68
      %p75 = scmp.eq.s32.totalorder %s25, 1
      %p76 = por %p74, %p75
      %p77 = scmp.ne.s32.totalorder %s68, %s69
      %p78 = scmp.eq.s32.totalorder %s25, 0
      %p79 = por %p77, %p78
      %p80 = scmp.ne.s32.totalorder %s68, %s69
      %p81 = scmp.eq.s32.totalorder %s26, 1
      %p82 = por %p80, %p81
      %p84 = scmp.ne.s32.totalorder %s69, %s83
      %p85 = scmp.eq.s32.totalorder %s26, 0
      %p86 = por %p84, %p85
      %s88 = sadd.s32 %s87, 1
      %p91 = scmp.eq.s32.totalorder %s20, 1
      %p92 = scmp.ne.s32.totalorder %s87, %s89
      %p93 = scmp.eq.s32.totalorder %s20, 0
      %p94 = por %p92, %p93
      %p95 = scmp.ne.s32.totalorder %s87, %s89
      %p96 = scmp.eq.s32.totalorder %s25, 1
      %p97 = por %p95, %p96
      %p98 = scmp.ne.s32.totalorder %s89, %s90
      %p99 = scmp.eq.s32.totalorder %s25, 0
      %p100 = por %p98, %p99
      %p101 = scmp.ne.s32.totalorder %s89, %s90
      %p102 = scmp.eq.s32.totalorder %s26, 1
      %p103 = por %p101, %p102
      %p105 = scmp.ne.s32.totalorder %s90, %s104
      %p106 = scmp.eq.s32.totalorder %s26, 0
      %p107 = por %p105, %p106
      %s109 = sadd.s32 %s108, 1
      %p112 = scmp.eq.s32.totalorder %s20, 1
      %p113 = scmp.ne.s32.totalorder %s108, %s110
      %p114 = scmp.eq.s32.totalorder %s20, 0
      %p115 = por %p113, %p114
      %p116 = scmp.ne.s32.totalorder %s108, %s110
      %p117 = scmp.eq.s32.totalorder %s25, 1
      %p118 = por %p116, %p117
      %p119 = scmp.ne.s32.totalorder %s110, %s111
      %p120 = scmp.eq.s32.totalorder %s25, 0
      %p121 = por %p119, %p120
      %p122 = scmp.ne.s32.totalorder %s110, %s111
      %p123 = scmp.eq.s32.totalorder %s26, 1
      %p124 = por %p122, %p123
      %p126 = scmp.ne.s32.totalorder %s111, %s125
      %p127 = scmp.eq.s32.totalorder %s26, 0
      %p128 = por %p126, %p127
      %s130 = sadd.s32 %s129, 1
      %p133 = scmp.eq.s32.totalorder %s20, 1
      %p134 = scmp.ne.s32.totalorder %s129, %s131
      %p135 = scmp.eq.s32.totalorder %s20, 0
      %p136 = por %p134, %p135
      %p137 = scmp.ne.s32.totalorder %s129, %s131
      %p138 = scmp.eq.s32.totalorder %s25, 1
      %p139 = por %p137, %p138
      %p140 = scmp.ne.s32.totalorder %s131, %s132
      %p141 = scmp.eq.s32.totalorder %s25, 0
      %p142 = por %p140, %p141
      %p143 = scmp.ne.s32.totalorder %s131, %s132
      %p144 = scmp.eq.s32.totalorder %s26, 1
      %p145 = por %p143, %p144
      %p147 = scmp.ne.s32.totalorder %s132, %s146
      %p148 = scmp.eq.s32.totalorder %s26, 0
      %p149 = por %p147, %p148
      %s150 = ssub.s32 %s28, %s35
      %p151 = scmp.eq.s32.totalorder %s150, 0
      %s153 = sadd.s32 %s152, 1
      %s154 = scalar_select %p151, %s152, %s153
      %p157 = pneg %p151
      %p158 = scmp.eq.s32.totalorder %s20, 1
      %p159 = por %p157, %p158
      %p160 = scmp.ne.s32.totalorder %s152, %s155
      %p161 = scmp.eq.s32.totalorder %s20, 0
      %p162 = por %p160, %p161
      %p163 = scmp.ne.s32.totalorder %s152, %s155
      %p164 = scmp.eq.s32.totalorder %s25, 1
      %p165 = por %p163, %p164
      %p166 = scmp.ne.s32.totalorder %s155, %s156
      %p167 = scmp.eq.s32.totalorder %s25, 0
      %p168 = por %p166, %p167
      %p169 = scmp.ne.s32.totalorder %s155, %s156
      %p170 = scmp.eq.s32.totalorder %s26, 1
      %p171 = por %p169, %p170
      %p173 = scmp.ne.s32.totalorder %s156, %s172
      %p174 = scmp.eq.s32.totalorder %s26, 0
      %p175 = por %p173, %p174
      %s176 = ssub.s32 %s28, %s35
      %p177 = scmp.eq.s32.totalorder %s176, 0
      %s179 = sadd.s32 %s178, 1
      %s180 = scalar_select %p177, %s178, %s179
      %p183 = pneg %p177
      %p184 = scmp.eq.s32.totalorder %s20, 1
      %p185 = por %p183, %p184
      %p186 = scmp.ne.s32.totalorder %s178, %s181
      %p187 = scmp.eq.s32.totalorder %s20, 0
      %p188 = por %p186, %p187
      %p189 = scmp.ne.s32.totalorder %s178, %s181
      %p190 = scmp.eq.s32.totalorder %s25, 1
      %p191 = por %p189, %p190
      %p192 = scmp.ne.s32.totalorder %s181, %s182
      %p193 = scmp.eq.s32.totalorder %s25, 0
      %p194 = por %p192, %p193
      %p195 = scmp.ne.s32.totalorder %s181, %s182
      %p196 = scmp.eq.s32.totalorder %s26, 1
      %p197 = por %p195, %p196
      %p199 = scmp.ne.s32.totalorder %s182, %s198
      %p200 = scmp.eq.s32.totalorder %s26, 0
      %p201 = por %p199, %p200
      %s202 = ssub.s32 %s27, %s39
      %s203 = ssub.s32 %s28, %s35
      %s204 = sor.u32 %s202, %s203
      %p205 = scmp.eq.s32.totalorder %s204, 0
      %s207 = sadd.s32 %s206, 1
      %s208 = scalar_select %p205, %s206, %s207
      %p211 = pneg %p205
      %p212 = scmp.eq.s32.totalorder %s20, 1
      %p213 = por %p211, %p212
      %p214 = scmp.ne.s32.totalorder %s206, %s209
      %p215 = scmp.eq.s32.totalorder %s20, 0
      %p216 = por %p214, %p215
      %p217 = scmp.ne.s32.totalorder %s206, %s209
      %p218 = scmp.eq.s32.totalorder %s25, 1
      %p219 = por %p217, %p218
      %p220 = scmp.ne.s32.totalorder %s209, %s210
      %p221 = scmp.eq.s32.totalorder %s25, 0
      %p222 = por %p220, %p221
      %p223 = scmp.ne.s32.totalorder %s209, %s210
      %p224 = scmp.eq.s32.totalorder %s26, 1
      %p225 = por %p223, %p224
      %p227 = scmp.ne.s32.totalorder %s210, %s226
      %p228 = scmp.eq.s32.totalorder %s26, 0
      %p229 = por %p227, %p228
      %p230 = scmp.le.s32.totalorder 1, %s20
      %p231 = scmp.lt.s32.totalorder %s20, 3
      %p232 = pnand %p230, %p231
      %p233 = pneg %p232
      // Predicated region
      $region9: #{tpu_custom_call.1} parent=5 // pred_check
        _
      $region10: #{tpu_custom_call.1} parent=5 // pred_check_branch
        %235 = sbr.rel (%p232) target = $region12
      $region11: #{tpu_custom_call.1} parent=5 // pred_region
        %s236 = ssub.s32 %s20, 1
        // Predicated region
        $region13: #{tpu_custom_call.1} parent=11 // pred_check
          %p237 = pneg %p79
        $region14: #{tpu_custom_call.1} parent=11 // pred_check_branch
          %239 = sbr.rel (%p237) target = $region16
        $region15: #{tpu_custom_call.1} parent=11 // pred_region
          %s241 = ssub.s32 512, 512
          %242 = vsyncadd [#allocation7], %s241
          %s243 = sshll.u32 [#allocation6], 4
          %s244 = int_to_ptr.vmem [resolvable:$true] %s243
          %249 = dma.hbm_to_vmem [thread:$0]  %s1, 512, %s244, [#allocation7], 128, 128, 8
        $region16: #{tpu_custom_call.1} parent=11 // pred_fallthru
          _
        // Predicated region
        $region17: #{tpu_custom_call.1} parent=11 // pred_check
          %p250 = pneg %p100
        $region18: #{tpu_custom_call.1} parent=11 // pred_check_branch
          %252 = sbr.rel (%p250) target = $region20
        $region19: #{tpu_custom_call.1} parent=11 // pred_region
          _
        $region20: #{tpu_custom_call.1} parent=11 // pred_fallthru
          _
        // Predicated region
        $region21: #{tpu_custom_call.1} parent=11 // pred_check
          %p253 = pneg %p121
        $region22: #{tpu_custom_call.1} parent=11 // pred_check_branch
          %255 = sbr.rel (%p253) target = $region24
        $region23: #{tpu_custom_call.1} parent=11 // pred_region
          _
        $region24: #{tpu_custom_call.1} parent=11 // pred_fallthru
          _
        // Predicated region
        $region25: #{tpu_custom_call.1} parent=11 // pred_check
          %p256 = pneg %p142
        $region26: #{tpu_custom_call.1} parent=11 // pred_check_branch
          %258 = sbr.rel (%p256) target = $region28
        $region27: #{tpu_custom_call.1} parent=11 // pred_region
          _
        $region28: #{tpu_custom_call.1} parent=11 // pred_fallthru
          _
        // Predicated region
        $region29: #{tpu_custom_call.1} parent=11 // pred_check
          %p259 = pneg %p168
        $region30: #{tpu_custom_call.1} parent=11 // pred_check_branch
          %261 = sbr.rel (%p259) target = $region32
        $region31: #{tpu_custom_call.1} parent=11 // pred_region
          %s263 = ssub.s32 512, 512
          %264 = vsyncadd [#allocation7], %s263
          %s265 = smul.addr %s30, 128
          %s266 = scalar_lea.hbm %s5, %s265
          %s267 = sshll.u32 [#allocation8], 4
          %s268 = int_to_ptr.vmem [resolvable:$true] %s267
          %273 = dma.hbm_to_vmem [thread:$0]  %s266, 512, %s268, [#allocation7], 128, 128, 8
        $region32: #{tpu_custom_call.1} parent=11 // pred_fallthru
          _
        // Predicated region
        $region33: #{tpu_custom_call.1} parent=11 // pred_check
          %p274 = pneg %p194
        $region34: #{tpu_custom_call.1} parent=11 // pred_check_branch
          %276 = sbr.rel (%p274) target = $region36
        $region35: #{tpu_custom_call.1} parent=11 // pred_region
          %p277 = scmp.lt.s32.totalorder %s30, 0
          %s278 = scalar_select %p277, %s30, 0
          %s279 = scalar_lea.vmem %s6, %s278
        $region36: #{tpu_custom_call.1} parent=11 // pred_fallthru
          _
      $region12: #{tpu_custom_call.1} parent=5 // pred_fallthru
        _
      %p280 = scmp.lt.s32.totalorder %s20, 2
      // Predicated region
      $region37: #{tpu_custom_call.1} parent=5 // pred_check
        %p281 = pneg %p280
      $region38: #{tpu_custom_call.1} parent=5 // pred_check_branch
        %283 = sbr.rel (%p281) target = $region40
      $region39: #{tpu_custom_call.1} parent=5 // pred_region
        // Predicated region
        $region41: #{tpu_custom_call.1} parent=39 // pred_check
          %p284 = pneg %p52
        $region42: #{tpu_custom_call.1} parent=39 // pred_check_branch
          %286 = sbr.rel (%p284) target = $region44
        $region43: #{tpu_custom_call.1} parent=39 // pred_region
          %s287 = sand.u32 %s42, 1
          %s288 = scalar_lea.sflag [#allocation4], %s287
          %s289 = sand.u32 %s42, 1
          %s290 = smul.addr %s289, 8
          %s291 = scalar_lea.vmem [#allocation3], %s290
          %s293 = ssub.s32 128, 128
          %294 = vsyncadd %s288, %s293
          %s295 = smul.addr %s27, 128
          %s296 = scalar_lea.hbm %s0, %s295
          %s298 = sshll.u32 %s291, 4
          %s299 = int_to_ptr.vmem [resolvable:$true] %s298
          %301 = dma.hbm_to_vmem [thread:$0]  %s296, 128, %s299, %s288
        $region44: #{tpu_custom_call.1} parent=39 // pred_fallthru
          _
      $region40: #{tpu_custom_call.1} parent=5 // pred_fallthru
        _
      %p302 = scmp.le.s32.totalorder 1, %s20
      %p303 = scmp.lt.s32.totalorder %s20, 3
      %p304 = pnand %p302, %p303
      %p305 = pneg %p304
      // Predicated region
      $region45: #{tpu_custom_call.1} parent=5 // pred_check
        _
      $region46: #{tpu_custom_call.1} parent=5 // pred_check_branch
        %307 = sbr.rel (%p304) target = $region48
      $region47: #{tpu_custom_call.1} parent=5 // pred_region
        %s308 = ssub.s32 %s20, 1
        %s309 = sand.u32 %s45, 1
        %s310 = scalar_lea.sflag [#allocation4], %s309
        %s311 = sand.u32 %s45, 1
        %s312 = smul.addr %s311, 8
        %s313 = scalar_lea.vmem [#allocation3], %s312
        // Predicated region
        $region49: #{tpu_custom_call.1} parent=47 // pred_check
          %p314 = pneg %p58
        $region50: #{tpu_custom_call.1} parent=47 // pred_check_branch
          %316 = sbr.rel (%p314) target = $region52
        $region51: #{tpu_custom_call.1} parent=47 // pred_region
          %317 = dma.done %s310, 128
        $region52: #{tpu_custom_call.1} parent=47 // pred_fallthru
          _
        // Predicated region
        $region53: #{tpu_custom_call.1} parent=47 // pred_check
          %p318 = pneg %p79
        $region54: #{tpu_custom_call.1} parent=47 // pred_check_branch
          %320 = sbr.rel (%p318) target = $region56
        $region55: #{tpu_custom_call.1} parent=47 // pred_region
          %321 = dma.done [#allocation7], 512
        $region56: #{tpu_custom_call.1} parent=47 // pred_fallthru
          _
        // Predicated region
        $region57: #{tpu_custom_call.1} parent=47 // pred_check
          %p322 = pneg %p168
        $region58: #{tpu_custom_call.1} parent=47 // pred_check_branch
          %324 = sbr.rel (%p322) target = $region60
        $region59: #{tpu_custom_call.1} parent=47 // pred_region
          %325 = dma.done [#allocation7], 512
        $region60: #{tpu_custom_call.1} parent=47 // pred_fallthru
          _
        %s326 = sand.u32 %s45, 1
        %s327 = scalar_lea.sflag [#allocation4], %s326
        %s328 = sand.u32 %s45, 1
        %s329 = smul.addr %s328, 8
        %s330 = scalar_lea.vmem [#allocation3], %s329
        %p331 = pneg %p58
        %p332 = pneg %p55
        %p333 = pneg %p79
        %p334 = pneg %p76
        %p335 = pneg %p100
        %p336 = pneg %p97
        %p337 = pneg %p121
        %p338 = pneg %p118
        %p339 = pneg %p142
        %p340 = pneg %p139
        %p341 = pneg %p168
        %p342 = pneg %p165
        %p343 = scmp.lt.s32.totalorder %s30, 0
        %s344 = scalar_select %p343, %s30, 0
        %s345 = scalar_lea.vmem %s6, %s344
        %p346 = pneg %p194
        %p347 = pneg %p191
        %p348 = pneg %p222
        %p349 = pneg %p219
        %s350 = sand.u32 %s209, 1
        %s351 = scalar_lea.sflag [#allocation5], %s350
        %s352 = sand.u32 %s209, 1
        %s353 = smul.addr %s352, 8
        %s354 = scalar_lea.vmem [#allocation9], %s353
        %p355 = scmp.lt.s32.totalorder %s30, 0
        %s356 = scalar_select %p355, %s30, 0
        %s357 = scalar_lea.vmem %s6, %s356
        %p358 = scmp.eq.s32.totalorder %s30, 0
        // Predicated region
        $region61: #{tpu_custom_call.1} parent=47 // pred_check
          %p359 = pneg %p358
        $region62: #{tpu_custom_call.1} parent=47 // pred_check_branch
          %361 = sbr.rel (%p359) target = $region64
        $region63: #{tpu_custom_call.1} parent=47 // pred_region
          %v362 = vld [vmem:[%s313] sm:$0xff]
          %v363 = vld [vmem:[#allocation6] sm:$0xff]
          %v364 = vld [vmem:[#allocation6 + $0x8] sm:$0xff]
          %v365 = vld [vmem:[#allocation6 + $0x10] sm:$0xff]
          %v366 = vld [vmem:[#allocation6 + $0x18] sm:$0xff]
          %v367 = vld [vmem:[%s2] sm:$0x1]
          %v369 = vlaneseq
          %v370 = vshrl.u32 %v369, 7
          %v371 = vsub.s32 0, %v370
          %v372 = vrot.slane %v367, %v371
          %vm374 = vcmask 261120
          %v376 = vsel %vm374, %v362, 0
          %378 = vmatprep.subr.mxu0 0.0
          %379 = vmatpush1.msra.mxu0 %v363
          %380 = vmatprep.subr.mxu0 0.0
          %381 = vmatpush1.msra.mxu0 %v364
          %382 = vmatprep.subr.mxu0 0.0
          %383 = vmatpush1.msra.mxu0 %v365
          %384 = vmatprep.subr.mxu0 0.0
          %385 = vmatpush1.msra.mxu0 %v366
          %386 = vmatprep.subr.mxu0 0.0
          %387 = vmatpush1.msra.mxu0 0.0
          %388 = vmatprep.subr.mxu0 0.0
          %389 = vmatpush1.msra.mxu0 0.0
          %390 = vmatprep.subr.mxu0 0.0
          %391 = vmatpush1.msra.mxu0 0.0
          %392 = vmatprep.subr.mxu0 0.0
          %393 = vmatpush1.msra.mxu0 0.0
          %394 = vmatprep.subr.mxu0 0.0
          %395 = vmatpush1.msra.mxu0 0.0
          %396 = vmatprep.subr.mxu0 0.0
          %397 = vmatpush1.msra.mxu0 0.0
          %398 = vmatprep.subr.mxu0 0.0
          %399 = vmatpush1.msra.mxu0 0.0
          %400 = vmatprep.subr.mxu0 0.0
          %401 = vmatpush1.msra.mxu0 0.0
          %402 = vmatprep.subr.mxu0 0.0
          %403 = vmatpush1.msra.mxu0 0.0
          %404 = vmatprep.subr.mxu0 0.0
          %405 = vmatpush1.msra.mxu0 0.0
          %406 = vmatprep.subr.mxu0 0.0
          %407 = vmatpush1.msra.mxu0 0.0
          %408 = vmatprep.subr.mxu0 0.0
          %409 = vmatpush1.msra.mxu0 0.0
          %410 = vmatprep.subr.mxu0 0.0
          %411 = vmatpush1.msra.mxu0 0.0
          %412 = vmatprep.subr.mxu0 0.0
          %413 = vmatpush1.msra.mxu0 0.0
          %414 = vmatprep.subr.mxu0 0.0
          %415 = vmatpush1.msra.mxu0 0.0
          %416 = vmatprep.subr.mxu0 0.0
          %417 = vmatpush1.msra.mxu0 0.0
          %418 = vmatprep.subr.mxu0 0.0
          %419 = vmatpush1.msra.mxu0 0.0
          %420 = vmatprep.subr.mxu0 0.0
          %421 = vmatpush1.msra.mxu0 0.0
          %422 = vmatprep.subr.mxu0 0.0
          %423 = vmatpush1.msra.mxu0 0.0
          %424 = vmatprep.subr.mxu0 0.0
          %425 = vmatpush1.msra.mxu0 0.0
          %426 = vmatprep.subr.mxu0 0.0
          %427 = vmatpush1.msra.mxu0 0.0
          %428 = vmatprep.subr.mxu0 0.0
          %429 = vmatpush1.msra.mxu0 0.0
          %430 = vmatprep.subr.mxu0 0.0
          %431 = vmatpush1.msra.mxu0 0.0
          %432 = vmatprep.subr.mxu0 0.0
          %433 = vmatpush1.msra.mxu0 0.0
          %434 = vmatprep.subr.mxu0 0.0
          %435 = vmatpush1.msra.mxu0 0.0
          %436 = vmatprep.subr.mxu0 0.0
          %437 = vmatpush1.msra.mxu0 0.0
          %438 = vmatprep.subr.mxu0 0.0
          %439 = vmatpush1.msra.mxu0 0.0
          %440 = vmatprep.subr.mxu0 0.0
          %441 = vmatpush1.msra.mxu0 0.0
          %442 = vmatprep.mubr.f32.mxu0 0.0
          %443 = vmatmul.mubr.f32.gmra.mrb[0].mxu0 %v376
          %v444 = vpop.f32.mrb[0].mxu0
          %v445 = vadd.f32 %v372, %v444
          %v446 = vpop.f32.mrb[0].mxu0
          %447 = vdwg.mxu0
          %v448 = vmul.f32 %v445, 0.5
          %v449 = vmul.f32 %v445, 0.70710677
          %v450 = verf.f32.pop %v449
          %v451 = vadd.f32 %v450, 1.0
          %v452 = vmul.f32 %v448, %v451
          %v453 = vsel %vm374, %v452, 0.0
          %454 = vadd.xlane.f32.xlu0 %v453
          %v455 = vpop.xlane.xlu0 %454
          %v456 = vrcp.pop 32.0
          %v457 = vmul.f32 %v455, %v456
          %v458 = vsub.f32 %v452, %v457
          %v459 = vmul.f32 %v458, %v458
          %v460 = vsel %vm374, %v459, 0.0
          %461 = vadd.xlane.f32.xlu0 %v460
          %v462 = vpop.xlane.xlu0 %461
          %v463 = vmul.f32 %v462, %v456
          %v464 = vadd.f32 %v463, 1e-05
          %v465 = vrsqrt.pop %v464
          %v466 = vmul.f32 %v458, %v465
          %v467 = vld [vmem:[%s3] sm:$0x1]
          %v469 = vlaneseq
          %v470 = vshrl.u32 %v469, 7
          %v471 = vsub.s32 0, %v470
          %v472 = vrot.slane %v467, %v471
          %v474 = vmul.f32 %v466, %v472
          %v475 = vld [vmem:[%s4] sm:$0x1]
          %v477 = vlaneseq
          %v478 = vshrl.u32 %v477, 7
          %v479 = vsub.s32 0, %v478
          %v480 = vrot.slane %v475, %v479
          %v482 = vadd.f32 %v474, %v480
          %483 = vst.msk [vmem:[#allocation2] sm:$0xff] %vm374, %v482
        $region64: #{tpu_custom_call.1} parent=47 // pred_fallthru
          _
        %v484 = vld [vmem:[#allocation2] sm:$0xff]
        %v485 = vld [vmem:[#allocation8] sm:$0xff]
        %v486 = vld [vmem:[#allocation8 + $0x8] sm:$0xff]
        %v487 = vld [vmem:[#allocation8 + $0x10] sm:$0xff]
        %v488 = vld [vmem:[#allocation8 + $0x18] sm:$0xff]
        %v489 = vld [vmem:[%s357] sm:$0x1]
        %v491 = vlaneseq
        %v492 = vshrl.u32 %v491, 7
        %v493 = vsub.s32 0, %v492
        %v494 = vrot.slane %v489, %v493
        %vm496 = vcmask 261120
        %v498 = vsel %vm496, %v484, 0
        %500 = vmatprep.subr.mxu0 0.0
        %501 = vmatpush1.msra.mxu0 %v485
        %502 = vmatprep.subr.mxu0 0.0
        %503 = vmatpush1.msra.mxu0 %v486
        %504 = vmatprep.subr.mxu0 0.0
        %505 = vmatpush1.msra.mxu0 %v487
        %506 = vmatprep.subr.mxu0 0.0
        %507 = vmatpush1.msra.mxu0 %v488
        %508 = vmatprep.subr.mxu0 0.0
        %509 = vmatpush1.msra.mxu0 0.0
        %510 = vmatprep.subr.mxu0 0.0
        %511 = vmatpush1.msra.mxu0 0.0
        %512 = vmatprep.subr.mxu0 0.0
        %513 = vmatpush1.msra.mxu0 0.0
        %514 = vmatprep.subr.mxu0 0.0
        %515 = vmatpush1.msra.mxu0 0.0
        %516 = vmatprep.subr.mxu0 0.0
        %517 = vmatpush1.msra.mxu0 0.0
        %518 = vmatprep.subr.mxu0 0.0
        %519 = vmatpush1.msra.mxu0 0.0
        %520 = vmatprep.subr.mxu0 0.0
        %521 = vmatpush1.msra.mxu0 0.0
        %522 = vmatprep.subr.mxu0 0.0
        %523 = vmatpush1.msra.mxu0 0.0
        %524 = vmatprep.subr.mxu0 0.0
        %525 = vmatpush1.msra.mxu0 0.0
        %526 = vmatprep.subr.mxu0 0.0
        %527 = vmatpush1.msra.mxu0 0.0
        %528 = vmatprep.subr.mxu0 0.0
        %529 = vmatpush1.msra.mxu0 0.0
        %530 = vmatprep.subr.mxu0 0.0
        %531 = vmatpush1.msra.mxu0 0.0
        %532 = vmatprep.subr.mxu0 0.0
        %533 = vmatpush1.msra.mxu0 0.0
        %534 = vmatprep.subr.mxu0 0.0
        %535 = vmatpush1.msra.mxu0 0.0
        %536 = vmatprep.subr.mxu0 0.0
        %537 = vmatpush1.msra.mxu0 0.0
        %538 = vmatprep.subr.mxu0 0.0
        %539 = vmatpush1.msra.mxu0 0.0
        %540 = vmatprep.subr.mxu0 0.0
        %541 = vmatpush1.msra.mxu0 0.0
        %542 = vmatprep.subr.mxu0 0.0
        %543 = vmatpush1.msra.mxu0 0.0
        %544 = vmatprep.subr.mxu0 0.0
        %545 = vmatpush1.msra.mxu0 0.0
        %546 = vmatprep.subr.mxu0 0.0
        %547 = vmatpush1.msra.mxu0 0.0
        %548 = vmatprep.subr.mxu0 0.0
        %549 = vmatpush1.msra.mxu0 0.0
        %550 = vmatprep.subr.mxu0 0.0
        %551 = vmatpush1.msra.mxu0 0.0
        %552 = vmatprep.subr.mxu0 0.0
        %553 = vmatpush1.msra.mxu0 0.0
        %554 = vmatprep.subr.mxu0 0.0
        %555 = vmatpush1.msra.mxu0 0.0
        %556 = vmatprep.subr.mxu0 0.0
        %557 = vmatpush1.msra.mxu0 0.0
        %558 = vmatprep.subr.mxu0 0.0
        %559 = vmatpush1.msra.mxu0 0.0
        %560 = vmatprep.subr.mxu0 0.0
        %561 = vmatpush1.msra.mxu0 0.0
        %562 = vmatprep.subr.mxu0 0.0
        %563 = vmatpush1.msra.mxu0 0.0
        %564 = vmatprep.mubr.f32.mxu0 0.0
        %565 = vmatmul.mubr.f32.gmra.mrb[0].mxu0 %v498
        %v566 = vpop.f32.mrb[0].mxu0
        %v567 = vadd.f32 %v494, %v566
        %v568 = vpop.f32.mrb[0].mxu0
        %569 = vdwg.mxu0
        %vm570 = vcmask 523264
        %571 = vst.msk [vmem:[%s354] sm:$0xff] %vm570, %v567
        %s572 = sand.u32 %s209, 1
        %s573 = scalar_lea.sflag [#allocation5], %s572
        %s574 = sand.u32 %s209, 1
        %s575 = smul.addr %s574, 8
        %s576 = scalar_lea.vmem [#allocation9], %s575
        // Predicated region
        $region65: #{tpu_custom_call.1} parent=47 // pred_check
          %p577 = pneg %p219
        $region66: #{tpu_custom_call.1} parent=47 // pred_check_branch
          %579 = sbr.rel (%p577) target = $region68
        $region67: #{tpu_custom_call.1} parent=47 // pred_region
          %s581 = ssub.s32 128, 128
          %582 = vsyncadd %s573, %s581
          %s583 = sadd.s32 %s30, %s29
          %s584 = smul.addr %s583, 128
          %s585 = scalar_lea.hbm %s7, %s584
          %s587 = sshll.u32 %s576, 4
          %s588 = int_to_ptr.vmem [resolvable:$true] %s587
          %590 = dma.vmem_to_hbm [thread:$0]  %s588, 128, %s585, %s573
        $region68: #{tpu_custom_call.1} parent=47 // pred_fallthru
          _
      $region48: #{tpu_custom_call.1} parent=5 // pred_fallthru
        _
      %p591 = scmp.le.s32.totalorder 2, %s20
      // Predicated region
      $region69: #{tpu_custom_call.1} parent=5 // pred_check
        %p592 = pneg %p591
      $region70: #{tpu_custom_call.1} parent=5 // pred_check_branch
        %594 = sbr.rel (%p592) target = $region72
      $region71: #{tpu_custom_call.1} parent=5 // pred_region
        %s595 = ssub.s32 %s20, 2
        // Predicated region
        $region73: #{tpu_custom_call.1} parent=71 // pred_check
          %p596 = pneg %p225
        $region74: #{tpu_custom_call.1} parent=71 // pred_check_branch
          %598 = sbr.rel (%p596) target = $region76
        $region75: #{tpu_custom_call.1} parent=71 // pred_region
          %s599 = sand.u32 %s210, 1
          %s600 = scalar_lea.sflag [#allocation5], %s599
          %s601 = sand.u32 %s210, 1
          %s602 = smul.addr %s601, 8
          %s603 = scalar_lea.vmem [#allocation9], %s602
          %604 = dma.done %s600, 128
        $region76: #{tpu_custom_call.1} parent=71 // pred_fallthru
          _
      $region72: #{tpu_custom_call.1} parent=5 // pred_fallthru
        _
    $region6: #{tpu_custom_call.1} parent=1 // loop_footer
      %s24 = sadd.s32 1, %s20
    $region7: #{tpu_custom_call.1} parent=1 // loop_footer_branch
      %19 = sbr.rel target = $region3
    $region8: #{tpu_custom_call.1} parent=1 // loop_exit
      _
    %605 = vsyncpa [#allocation4], 1
    %s606 = scalar_lea.sflag [#allocation4], 1
    %607 = vsyncpa %s606, 1
    %608 = vsyncpa [#allocation7], 1
    %609 = vsyncpa [#allocation5], 1
    %s610 = scalar_lea.sflag [#allocation5], 1
    %611 = vsyncpa %s610, 1

// kernel: tpu_custom_call.1
$region0: #{tpu_custom_call.1}
  #allocation0 [shape = 'u32[]', space=smem, size = 0x4, offset = 0x4, fixed_abs, tag = 'smem constant byte address 0x4 - core index']
  #allocation1 [shape = 'u32[144,128]{1,0:T(1,128)}', space=vmem, size = 0x12000, scoped, tag = 'internal scratch']
  #allocation2 [shape = 'f32[8,32]{1,0:T(8,128)}', space=vmem, size = 0x1000, scoped, tag = 'scratch operand']
  %s0 = inlined_call_operand.hbm [shape: f32[16,32], index: 0, kind: input, shape index: {}]
  %s1 = inlined_call_operand.hbm [shape: f32[32,32], index: 1, kind: input, shape index: {}]
  %s2 = inlined_call_operand.vmem [shape: f32[1,32], index: 2, kind: input, shape index: {}]
  %s3 = inlined_call_operand.vmem [shape: f32[1,32], index: 3, kind: input, shape index: {}]
  %s4 = inlined_call_operand.vmem [shape: f32[1,32], index: 4, kind: input, shape index: {}]
  %s5 = inlined_call_operand.hbm [shape: f32[32,64], index: 5, kind: input, shape index: {}]
  %s6 = inlined_call_operand.vmem [shape: f32[1,64], index: 6, kind: input, shape index: {}]
  %s7 = inlined_call_operand.hbm [shape: f32[16,64], index: 7, kind: output, shape index: {}]
  %s8 = sld [smem:[#allocation0]]
  $region77: #{tpu_custom_call.1} parent=0
    _
  %s10 = ssub.s32 1, %s8
  %s11 = scalar_select 0, %s10, %s8
  $region1: #{tpu_custom_call.1} parent=0
    #allocation3 [shape = 'u8[8192]{0}', space=vmem, size = 0x2000, scoped, tag = 'input window, operand 0']
    #allocation4 [shape = 's32[2]{0}', space=sflag, size = 0x8, scoped, tag = 'scoped memory for tpu_custom_call.1']
    #allocation5 [shape = 's32[2]{0}', space=sflag, size = 0x8, scoped, tag = 'scoped memory for tpu_custom_call.1']
    #allocation6 [shape = 'u8[16384]{0}', space=vmem, size = 0x4000, scoped, tag = 'input window, operand 1, single buffered']
    #allocation7 [shape = 's32[1]{0}', space=sflag, size = 0x4, scoped, tag = 'scoped memory for tpu_custom_call.1']
    #allocation8 [shape = 'u8[16384]{0}', space=vmem, size = 0x4000, scoped, tag = 'input window, operand 5, single buffered']
    #allocation9 [shape = 'u8[8192]{0}', space=vmem, size = 0x2000, scoped, tag = 'output window, operand 0']
    %12 = vsyncpa [#allocation4], 0
    %s13 = scalar_lea.sflag [#allocation4], 1
    %14 = vsyncpa %s13, 0
    %15 = vsyncpa [#allocation7], 0
    %16 = vsyncpa [#allocation5], 0
    %s17 = scalar_lea.sflag [#allocation5], 1
    %18 = vsyncpa %s17, 0
    loop: start=0, step=1, limit=4
    $region2: #{tpu_custom_call.1} parent=1 // loop_pre_header
      _
    $region3: #{tpu_custom_call.1} parent=1 // loop_header
      %s20 = sphi 0, %s24
      %p21 = scmp.ge.s32.totalorder %s20, 4
      %s27 = sphi 0, %s39
      %s28 = sphi 0, %s35
      %s29 = sphi 0, %s27
      %s30 = sphi 0, %s28
      %s31 = sphi 0, %s29
      %s32 = sphi 0, %s30
      %s42 = sphi 0, %s44
      %s45 = sphi 0, %s42
      %s46 = sphi 0, %s45
      %s62 = sphi 0, %s46
      %s66 = sphi 0, %s66
      %s68 = sphi 0, %s66
      %s69 = sphi 0, %s68
      %s83 = sphi 0, %s69
      %s87 = sphi 0, %s87
      %s89 = sphi 0, %s87
      %s90 = sphi 0, %s89
      %s104 = sphi 0, %s90
      %s108 = sphi 0, %s108
      %s110 = sphi 0, %s108
      %s111 = sphi 0, %s110
      %s125 = sphi 0, %s111
      %s129 = sphi 0, %s129
      %s131 = sphi 0, %s129
      %s132 = sphi 0, %s131
      %s146 = sphi 0, %s132
      %s152 = sphi 0, %s154
      %s155 = sphi 0, %s152
      %s156 = sphi 0, %s155
      %s172 = sphi 0, %s156
      %s178 = sphi 0, %s180
      %s181 = sphi 0, %s178
      %s182 = sphi 0, %s181
      %s198 = sphi 0, %s182
      %s206 = sphi 0, %s208
      %s209 = sphi 0, %s206
      %s210 = sphi 0, %s209
      %s226 = sphi 0, %s210
    $region4: #{tpu_custom_call.1} parent=1 // loop_header_branch
      %23 = sbr.rel (%p21) target = $region8
    $region5: #{tpu_custom_call.1} parent=1 // loop_body
      %s25 = ssub.s32 %s20, 1
      %s26 = ssub.s32 %s20, 2
      %s33 = sadd.s32 1, %s28
      %p34 = scmp.ge.s32.totalorder %s33, 1
      %s35 = scalar_select %p34, 0, %s33
      %s36 = sadd.s32 1, %s27
      %s37 = scalar_select %p34, %s36, %s27
      %p38 = scmp.ge.s32.totalorder %s37, 2
      %s39 = scalar_select %p38, 0, %s37
      %s40 = ssub.s32 %s27, %s39
      %p41 = scmp.eq.s32.totalorder %s40, 0
      %s43 = sadd.s32 %s42, 1
      %s44 = scalar_select %p41, %s42, %s43
      %p47 = pneg %p41
      %p48 = scmp.eq.s32.totalorder %s20, 1
      %p49 = por %p47, %p48
      %p50 = scmp.ne.s32.totalorder %s42, %s45
      %p51 = scmp.eq.s32.totalorder %s20, 0
      %p52 = por %p50, %p51
      %p53 = scmp.ne.s32.totalorder %s42, %s45
      %p54 = scmp.eq.s32.totalorder %s25, 1
      %p55 = por %p53, %p54
      %p56 = scmp.ne.s32.totalorder %s45, %s46
      %p57 = scmp.eq.s32.totalorder %s25, 0
      %p58 = por %p56, %p57
      %p59 = scmp.ne.s32.totalorder %s45, %s46
      %p60 = scmp.eq.s32.totalorder %s26, 1
      %p61 = por %p59, %p60
      %p63 = scmp.ne.s32.totalorder %s46, %s62
      %p64 = scmp.eq.s32.totalorder %s26, 0
      %p65 = por %p63, %p64
      %s67 = sadd.s32 %s66, 1
      %p70 = scmp.eq.s32.totalorder %s20, 1
      %p71 = scmp.ne.s32.totalorder %s66, %s68
      %p72 = scmp.eq.s32.totalorder %s20, 0
      %p73 = por %p71, %p72
      %p74 = scmp.ne.s32.totalorder %s66, %s68
      %p75 = scmp.eq.s32.totalorder %s25, 1
      %p76 = por %p74, %p75
      %p77 = scmp.ne.s32.totalorder %s68, %s69
      %p78 = scmp.eq.s32.totalorder %s25, 0
      %p79 = por %p77, %p78
      %p80 = scmp.ne.s32.totalorder %s68, %s69
      %p81 = scmp.eq.s32.totalorder %s26, 1
      %p82 = por %p80, %p81
      %p84 = scmp.ne.s32.totalorder %s69, %s83
      %p85 = scmp.eq.s32.totalorder %s26, 0
      %p86 = por %p84, %p85
      %s88 = sadd.s32 %s87, 1
      %p91 = scmp.eq.s32.totalorder %s20, 1
      %p92 = scmp.ne.s32.totalorder %s87, %s89
      %p93 = scmp.eq.s32.totalorder %s20, 0
      %p94 = por %p92, %p93
      %p95 = scmp.ne.s32.totalorder %s87, %s89
      %p96 = scmp.eq.s32.totalorder %s25, 1
      %p97 = por %p95, %p96
      %p98 = scmp.ne.s32.totalorder %s89, %s90
      %p99 = scmp.eq.s32.totalorder %s25, 0
      %p100 = por %p98, %p99
      %p101 = scmp.ne.s32.totalorder %s89, %s90
      %p102 = scmp.eq.s32.totalorder %s26, 1
      %p103 = por %p101, %p102
      %p105 = scmp.ne.s32.totalorder %s90, %s104
      %p106 = scmp.eq.s32.totalorder %s26, 0
      %p107 = por %p105, %p106
      %s109 = sadd.s32 %s108, 1
      %p112 = scmp.eq.s32.totalorder %s20, 1
      %p113 = scmp.ne.s32.totalorder %s108, %s110
      %p114 = scmp.eq.s32.totalorder %s20, 0
      %p115 = por %p113, %p114
      %p116 = scmp.ne.s32.totalorder %s108, %s110
      %p117 = scmp.eq.s32.totalorder %s25, 1
      %p118 = por %p116, %p117
      %p119 = scmp.ne.s32.totalorder %s110, %s111
      %p120 = scmp.eq.s32.totalorder %s25, 0
      %p121 = por %p119, %p120
      %p122 = scmp.ne.s32.totalorder %s110, %s111
      %p123 = scmp.eq.s32.totalorder %s26, 1
      %p124 = por %p122, %p123
      %p126 = scmp.ne.s32.totalorder %s111, %s125
      %p127 = scmp.eq.s32.totalorder %s26, 0
      %p128 = por %p126, %p127
      %s130 = sadd.s32 %s129, 1
      %p133 = scmp.eq.s32.totalorder %s20, 1
      %p134 = scmp.ne.s32.totalorder %s129, %s131
      %p135 = scmp.eq.s32.totalorder %s20, 0
      %p136 = por %p134, %p135
      %p137 = scmp.ne.s32.totalorder %s129, %s131
      %p138 = scmp.eq.s32.totalorder %s25, 1
      %p139 = por %p137, %p138
      %p140 = scmp.ne.s32.totalorder %s131, %s132
      %p141 = scmp.eq.s32.totalorder %s25, 0
      %p142 = por %p140, %p141
      %p143 = scmp.ne.s32.totalorder %s131, %s132
      %p144 = scmp.eq.s32.totalorder %s26, 1
      %p145 = por %p143, %p144
      %p147 = scmp.ne.s32.totalorder %s132, %s146
      %p148 = scmp.eq.s32.totalorder %s26, 0
      %p149 = por %p147, %p148
      %s150 = ssub.s32 %s28, %s35
      %p151 = scmp.eq.s32.totalorder %s150, 0
      %s153 = sadd.s32 %s152, 1
      %s154 = scalar_select %p151, %s152, %s153
      %p157 = pneg %p151
      %p158 = scmp.eq.s32.totalorder %s20, 1
      %p159 = por %p157, %p158
      %p160 = scmp.ne.s32.totalorder %s152, %s155
      %p161 = scmp.eq.s32.totalorder %s20, 0
      %p162 = por %p160, %p161
      %p163 = scmp.ne.s32.totalorder %s152, %s155
      %p164 = scmp.eq.s32.totalorder %s25, 1
      %p165 = por %p163, %p164
      %p166 = scmp.ne.s32.totalorder %s155, %s156
      %p167 = scmp.eq.s32.totalorder %s25, 0
      %p168 = por %p166, %p167
      %p169 = scmp.ne.s32.totalorder %s155, %s156
      %p170 = scmp.eq.s32.totalorder %s26, 1
      %p171 = por %p169, %p170
      %p173 = scmp.ne.s32.totalorder %s156, %s172
      %p174 = scmp.eq.s32.totalorder %s26, 0
      %p175 = por %p173, %p174
      %s176 = ssub.s32 %s28, %s35
      %p177 = scmp.eq.s32.totalorder %s176, 0
      %s179 = sadd.s32 %s178, 1
      %s180 = scalar_select %p177, %s178, %s179
      %p183 = pneg %p177
      %p184 = scmp.eq.s32.totalorder %s20, 1
      %p185 = por %p183, %p184
      %p186 = scmp.ne.s32.totalorder %s178, %s181
      %p187 = scmp.eq.s32.totalorder %s20, 0
      %p188 = por %p186, %p187
      %p189 = scmp.ne.s32.totalorder %s178, %s181
      %p190 = scmp.eq.s32.totalorder %s25, 1
      %p191 = por %p189, %p190
      %p192 = scmp.ne.s32.totalorder %s181, %s182
      %p193 = scmp.eq.s32.totalorder %s25, 0
      %p194 = por %p192, %p193
      %p195 = scmp.ne.s32.totalorder %s181, %s182
      %p196 = scmp.eq.s32.totalorder %s26, 1
      %p197 = por %p195, %p196
      %p199 = scmp.ne.s32.totalorder %s182, %s198
      %p200 = scmp.eq.s32.totalorder %s26, 0
      %p201 = por %p199, %p200
      %s202 = ssub.s32 %s27, %s39
      %s203 = ssub.s32 %s28, %s35
      %s204 = sor.u32 %s202, %s203
      %p205 = scmp.eq.s32.totalorder %s204, 0
      %s207 = sadd.s32 %s206, 1
      %s208 = scalar_select %p205, %s206, %s207
      %p211 = pneg %p205
      %p212 = scmp.eq.s32.totalorder %s20, 1
      %p213 = por %p211, %p212
      %p214 = scmp.ne.s32.totalorder %s206, %s209
      %p215 = scmp.eq.s32.totalorder %s20, 0
      %p216 = por %p214, %p215
      %p217 = scmp.ne.s32.totalorder %s206, %s209
      %p218 = scmp.eq.s32.totalorder %s25, 1
      %p219 = por %p217, %p218
      %p220 = scmp.ne.s32.totalorder %s209, %s210
      %p221 = scmp.eq.s32.totalorder %s25, 0
      %p222 = por %p220, %p221
      %p223 = scmp.ne.s32.totalorder %s209, %s210
      %p224 = scmp.eq.s32.totalorder %s26, 1
      %p225 = por %p223, %p224
      %p227 = scmp.ne.s32.totalorder %s210, %s226
      %p228 = scmp.eq.s32.totalorder %s26, 0
      %p229 = por %p227, %p228
      %p230 = scmp.le.s32.totalorder 1, %s20
      %p231 = scmp.lt.s32.totalorder %s20, 3
      %p232 = pnand %p230, %p231
      %p233 = pneg %p232
      // Predicated region
      $region9: #{tpu_custom_call.1} parent=5 // pred_check
        _
      $region10: #{tpu_custom_call.1} parent=5 // pred_check_branch
        %235 = sbr.rel (%p232) target = $region12
      $region11: #{tpu_custom_call.1} parent=5 // pred_region
        %s236 = ssub.s32 %s20, 1
        // Predicated region
        $region13: #{tpu_custom_call.1} parent=11 // pred_check
          %p237 = pneg %p79
        $region14: #{tpu_custom_call.1} parent=11 // pred_check_branch
          %239 = sbr.rel (%p237) target = $region16
        $region15: #{tpu_custom_call.1} parent=11 // pred_region
          %s241 = ssub.s32 512, 512
          %242 = vsyncadd [#allocation7], %s241
          %s243 = sshll.u32 [#allocation6], 4
          %s244 = int_to_ptr.vmem [resolvable:$true] %s243
          %249 = dma.hbm_to_vmem [thread:$0]  %s1, 512, %s244, [#allocation7], 128, 128, 8
        $region16: #{tpu_custom_call.1} parent=11 // pred_fallthru
          _
        // Predicated region
        $region17: #{tpu_custom_call.1} parent=11 // pred_check
          %p250 = pneg %p100
        $region18: #{tpu_custom_call.1} parent=11 // pred_check_branch
          %252 = sbr.rel (%p250) target = $region20
        $region19: #{tpu_custom_call.1} parent=11 // pred_region
          _
        $region20: #{tpu_custom_call.1} parent=11 // pred_fallthru
          _
        // Predicated region
        $region21: #{tpu_custom_call.1} parent=11 // pred_check
          %p253 = pneg %p121
        $region22: #{tpu_custom_call.1} parent=11 // pred_check_branch
          %255 = sbr.rel (%p253) target = $region24
        $region23: #{tpu_custom_call.1} parent=11 // pred_region
          _
        $region24: #{tpu_custom_call.1} parent=11 // pred_fallthru
          _
        // Predicated region
        $region25: #{tpu_custom_call.1} parent=11 // pred_check
          %p256 = pneg %p142
        $region26: #{tpu_custom_call.1} parent=11 // pred_check_branch
          %258 = sbr.rel (%p256) target = $region28
        $region27: #{tpu_custom_call.1} parent=11 // pred_region
          _
        $region28: #{tpu_custom_call.1} parent=11 // pred_fallthru
          _
        // Predicated region
        $region29: #{tpu_custom_call.1} parent=11 // pred_check
          %p259 = pneg %p168
        $region30: #{tpu_custom_call.1} parent=11 // pred_check_branch
          %261 = sbr.rel (%p259) target = $region32
        $region31: #{tpu_custom_call.1} parent=11 // pred_region
          %s263 = ssub.s32 512, 512
          %264 = vsyncadd [#allocation7], %s263
          %s265 = smul.addr %s30, 128
          %s266 = scalar_lea.hbm %s5, %s265
          %s267 = sshll.u32 [#allocation8], 4
          %s268 = int_to_ptr.vmem [resolvable:$true] %s267
          %273 = dma.hbm_to_vmem [thread:$0]  %s266, 512, %s268, [#allocation7], 128, 128, 8
        $region32: #{tpu_custom_call.1} parent=11 // pred_fallthru
          _
        // Predicated region
        $region33: #{tpu_custom_call.1} parent=11 // pred_check
          %p274 = pneg %p194
        $region34: #{tpu_custom_call.1} parent=11 // pred_check_branch
          %276 = sbr.rel (%p274) target = $region36
        $region35: #{tpu_custom_call.1} parent=11 // pred_region
          %p277 = scmp.lt.s32.totalorder %s30, 0
          %s278 = scalar_select %p277, %s30, 0
          %s279 = scalar_lea.vmem %s6, %s278
        $region36: #{tpu_custom_call.1} parent=11 // pred_fallthru
          _
      $region12: #{tpu_custom_call.1} parent=5 // pred_fallthru
        _
      %p280 = scmp.lt.s32.totalorder %s20, 2
      // Predicated region
      $region37: #{tpu_custom_call.1} parent=5 // pred_check
        %p281 = pneg %p280
      $region38: #{tpu_custom_call.1} parent=5 // pred_check_branch
        %283 = sbr.rel (%p281) target = $region40
      $region39: #{tpu_custom_call.1} parent=5 // pred_region
        // Predicated region
        $region41: #{tpu_custom_call.1} parent=39 // pred_check
          %p284 = pneg %p52
        $region42: #{tpu_custom_call.1} parent=39 // pred_check_branch
          %286 = sbr.rel (%p284) target = $region44
        $region43: #{tpu_custom_call.1} parent=39 // pred_region
          %s287 = sand.u32 %s42, 1
          %s288 = scalar_lea.sflag [#allocation4], %s287
          %s289 = sand.u32 %s42, 1
          %s290 = smul.addr %s289, 8
          %s291 = scalar_lea.vmem [#allocation3], %s290
          %s293 = ssub.s32 128, 128
          %294 = vsyncadd %s288, %s293
          %s295 = smul.addr %s27, 128
          %s296 = scalar_lea.hbm %s0, %s295
          %s298 = sshll.u32 %s291, 4
          %s299 = int_to_ptr.vmem [resolvable:$true] %s298
          %301 = dma.hbm_to_vmem [thread:$0]  %s296, 128, %s299, %s288
        $region44: #{tpu_custom_call.1} parent=39 // pred_fallthru
          _
      $region40: #{tpu_custom_call.1} parent=5 // pred_fallthru
        _
      %p302 = scmp.le.s32.totalorder 1, %s20
      %p303 = scmp.lt.s32.totalorder %s20, 3
      %p304 = pnand %p302, %p303
      %p305 = pneg %p304
      // Predicated region
      $region45: #{tpu_custom_call.1} parent=5 // pred_check
        _
      $region46: #{tpu_custom_call.1} parent=5 // pred_check_branch
        %307 = sbr.rel (%p304) target = $region48
      $region47: #{tpu_custom_call.1} parent=5 // pred_region
        %s308 = ssub.s32 %s20, 1
        %s309 = sand.u32 %s45, 1
        %s310 = scalar_lea.sflag [#allocation4], %s309
        %s311 = sand.u32 %s45, 1
        %s312 = smul.addr %s311, 8
        %s313 = scalar_lea.vmem [#allocation3], %s312
        // Predicated region
        $region49: #{tpu_custom_call.1} parent=47 // pred_check
          %p314 = pneg %p58
        $region50: #{tpu_custom_call.1} parent=47 // pred_check_branch
          %316 = sbr.rel (%p314) target = $region52
        $region51: #{tpu_custom_call.1} parent=47 // pred_region
          %317 = dma.done %s310, 128
        $region52: #{tpu_custom_call.1} parent=47 // pred_fallthru
          _
        // Predicated region
        $region53: #{tpu_custom_call.1} parent=47 // pred_check
          %p318 = pneg %p79
        $region54: #{tpu_custom_call.1} parent=47 // pred_check_branch
          %320 = sbr.rel (%p318) target = $region56
        $region55: #{tpu_custom_call.1} parent=47 // pred_region
          %321 = dma.done [#allocation7], 512
        $region56: #{tpu_custom_call.1} parent=47 // pred_fallthru
          _
        // Predicated region
        $region57: #{tpu_custom_call.1} parent=47 // pred_check
          %p322 = pneg %p168
        $region58: #{tpu_custom_call.1} parent=47 // pred_check_branch
          %324 = sbr.rel (%p322) target = $region60
        $region59: #{tpu_custom_call.1} parent=47 // pred_region
          %325 = dma.done [#allocation7], 512
        $region60: #{tpu_custom_call.1} parent=47 // pred_fallthru
          _
        %s326 = sand.u32 %s45, 1
        %s327 = scalar_lea.sflag [#allocation4], %s326
        %s328 = sand.u32 %s45, 1
        %s329 = smul.addr %s328, 8
        %s330 = scalar_lea.vmem [#allocation3], %s329
        %p331 = pneg %p58
        %p332 = pneg %p55
        %p333 = pneg %p79
        %p334 = pneg %p76
        %p335 = pneg %p100
        %p336 = pneg %p97
        %p337 = pneg %p121
        %p338 = pneg %p118
        %p339 = pneg %p142
        %p340 = pneg %p139
        %p341 = pneg %p168
        %p342 = pneg %p165
        %p343 = scmp.lt.s32.totalorder %s30, 0
        %s344 = scalar_select %p343, %s30, 0
        %s345 = scalar_lea.vmem %s6, %s344
        %p346 = pneg %p194
        %p347 = pneg %p191
        %p348 = pneg %p222
        %p349 = pneg %p219
        %s350 = sand.u32 %s209, 1
        %s351 = scalar_lea.sflag [#allocation5], %s350
        %s352 = sand.u32 %s209, 1
        %s353 = smul.addr %s352, 8
        %s354 = scalar_lea.vmem [#allocation9], %s353
        %p355 = scmp.lt.s32.totalorder %s30, 0
        %s356 = scalar_select %p355, %s30, 0
        %s357 = scalar_lea.vmem %s6, %s356
        %p358 = scmp.eq.s32.totalorder %s30, 0
        // Predicated region
        $region61: #{tpu_custom_call.1} parent=47 // pred_check
          %p359 = pneg %p358
        $region62: #{tpu_custom_call.1} parent=47 // pred_check_branch
          %361 = sbr.rel (%p359) target = $region64
        $region63: #{tpu_custom_call.1} parent=47 // pred_region
          %v362 = vld [vmem:[%s313] sm:$0xff]
          %v363 = vld [vmem:[#allocation6] sm:$0xff]
          %v364 = vld [vmem:[#allocation6 + $0x8] sm:$0xff]
          %v365 = vld [vmem:[#allocation6 + $0x10] sm:$0xff]
          %v366 = vld [vmem:[#allocation6 + $0x18] sm:$0xff]
          %v367 = vld [vmem:[%s2] sm:$0x1]
          %v369 = vlaneseq
          %v370 = vshrl.u32 %v369, 7
          %v371 = vsub.s32 0, %v370
          %v372 = vrot.slane %v367, %v371
          %vm374 = vcmask 261120
          %v376 = vsel %vm374, %v362, 0
          %378 = vmatprep.subr.mxu0 0.0
          %379 = vmatpush1.msra.mxu0 %v363
          %380 = vmatprep.subr.mxu0 0.0
          %381 = vmatpush1.msra.mxu0 %v364
          %382 = vmatprep.subr.mxu0 0.0
          %383 = vmatpush1.msra.mxu0 %v365
          %384 = vmatprep.subr.mxu0 0.0
          %385 = vmatpush1.msra.mxu0 %v366
          %386 = vmatprep.subr.mxu0 0.0
          %387 = vmatpush1.msra.mxu0 0.0
          %388 = vmatprep.subr.mxu0 0.0
          %389 = vmatpush1.msra.mxu0 0.0
          %390 = vmatprep.subr.mxu0 0.0
          %391 = vmatpush1.msra.mxu0 0.0
          %392 = vmatprep.subr.mxu0 0.0
          %393 = vmatpush1.msra.mxu0 0.0
          %394 = vmatprep.subr.mxu0 0.0
          %395 = vmatpush1.msra.mxu0 0.0
          %396 = vmatprep.subr.mxu0 0.0
          %397 = vmatpush1.msra.mxu0 0.0
          %398 = vmatprep.subr.mxu0 0.0
          %399 = vmatpush1.msra.mxu0 0.0
          %400 = vmatprep.subr.mxu0 0.0
          %401 = vmatpush1.msra.mxu0 0.0
          %402 = vmatprep.subr.mxu0 0.0
          %403 = vmatpush1.msra.mxu0 0.0
          %404 = vmatprep.subr.mxu0 0.0
          %405 = vmatpush1.msra.mxu0 0.0
          %406 = vmatprep.subr.mxu0 0.0
          %407 = vmatpush1.msra.mxu0 0.0
          %408 = vmatprep.subr.mxu0 0.0
          %409 = vmatpush1.msra.mxu0 0.0
          %410 = vmatprep.subr.mxu0 0.0
          %411 = vmatpush1.msra.mxu0 0.0
          %412 = vmatprep.subr.mxu0 0.0
          %413 = vmatpush1.msra.mxu0 0.0
          %414 = vmatprep.subr.mxu0 0.0
          %415 = vmatpush1.msra.mxu0 0.0
          %416 = vmatprep.subr.mxu0 0.0
          %417 = vmatpush1.msra.mxu0 0.0
          %418 = vmatprep.subr.mxu0 0.0
          %419 = vmatpush1.msra.mxu0 0.0
          %420 = vmatprep.subr.mxu0 0.0
          %421 = vmatpush1.msra.mxu0 0.0
          %422 = vmatprep.subr.mxu0 0.0
          %423 = vmatpush1.msra.mxu0 0.0
          %424 = vmatprep.subr.mxu0 0.0
          %425 = vmatpush1.msra.mxu0 0.0
          %426 = vmatprep.subr.mxu0 0.0
          %427 = vmatpush1.msra.mxu0 0.0
          %428 = vmatprep.subr.mxu0 0.0
          %429 = vmatpush1.msra.mxu0 0.0
          %430 = vmatprep.subr.mxu0 0.0
          %431 = vmatpush1.msra.mxu0 0.0
          %432 = vmatprep.subr.mxu0 0.0
          %433 = vmatpush1.msra.mxu0 0.0
          %434 = vmatprep.subr.mxu0 0.0
          %435 = vmatpush1.msra.mxu0 0.0
          %436 = vmatprep.subr.mxu0 0.0
          %437 = vmatpush1.msra.mxu0 0.0
          %438 = vmatprep.subr.mxu0 0.0
          %439 = vmatpush1.msra.mxu0 0.0
          %440 = vmatprep.subr.mxu0 0.0
          %441 = vmatpush1.msra.mxu0 0.0
          %442 = vmatprep.mubr.f32.mxu0 0.0
          %443 = vmatmul.mubr.f32.gmra.mrb[0].mxu0 %v376
          %v444 = vpop.f32.mrb[0].mxu0
          %v445 = vadd.f32 %v372, %v444
          %v446 = vpop.f32.mrb[0].mxu0
          %447 = vdwg.mxu0
          %v448 = vmul.f32 %v445, 0.5
          %v449 = vmul.f32 %v445, 0.70710677
          %v450 = verf.f32.pop %v449
          %v451 = vadd.f32 %v450, 1.0
          %v452 = vmul.f32 %v448, %v451
          %v453 = vsel %vm374, %v452, 0.0
          %454 = vadd.xlane.f32.xlu0 %v453
          %v455 = vpop.xlane.xlu0 %454
          %v456 = vrcp.pop 32.0
          %v457 = vmul.f32 %v455, %v456
          %v458 = vsub.f32 %v452, %v457
          %v459 = vmul.f32 %v458, %v458
          %v460 = vsel %vm374, %v459, 0.0
          %461 = vadd.xlane.f32.xlu0 %v460
          %v462 = vpop.xlane.xlu0 %461
          %v463 = vmul.f32 %v462, %v456
          %v464 = vadd.f32 %v463, 1e-05
          %v465 = vrsqrt.pop %v464
          %v466 = vmul.f32 %v458, %v465
          %v467 = vld [vmem:[%s3] sm:$0x1]
          %v469 = vlaneseq
          %v470 = vshrl.u32 %v469, 7
          %v471 = vsub.s32 0, %v470
          %v472 = vrot.slane %v467, %v471
          %v474 = vmul.f32 %v466, %v472
          %v475 = vld [vmem:[%s4] sm:$0x1]
          %v477 = vlaneseq
          %v478 = vshrl.u32 %v477, 7
          %v479 = vsub.s32 0, %v478
          %v480 = vrot.slane %v475, %v479
          %v482 = vadd.f32 %v474, %v480
          %483 = vst.msk [vmem:[#allocation2] sm:$0xff] %vm374, %v482
        $region64: #{tpu_custom_call.1} parent=47 // pred_fallthru
          _
        %v484 = vld [vmem:[#allocation2] sm:$0xff]
        %v485 = vld [vmem:[#allocation8] sm:$0xff]
        %v486 = vld [vmem:[#allocation8 + $0x8] sm:$0xff]
        %v487 = vld [vmem:[#allocation8 + $0x10] sm:$0xff]
        %v488 = vld [vmem:[#allocation8 + $0x18] sm:$0xff]
        %v489 = vld [vmem:[%s357] sm:$0x1]
        %v491 = vlaneseq
        %v492 = vshrl.u32 %v491, 7
        %v493 = vsub.s32 0, %v492
        %v494 = vrot.slane %v489, %v493
        %vm496 = vcmask 261120
        %v498 = vsel %vm496, %v484, 0
        %500 = vmatprep.subr.mxu0 0.0
        %501 = vmatpush1.msra.mxu0 %v485
        %502 = vmatprep.subr.mxu0 0.0
        %503 = vmatpush1.msra.mxu0 %v486
        %504 = vmatprep.subr.mxu0 0.0
        %505 = vmatpush1.msra.mxu0 %v487
        %506 = vmatprep.subr.mxu0 0.0
        %507 = vmatpush1.msra.mxu0 %v488
        %508 = vmatprep.subr.mxu0 0.0
        %509 = vmatpush1.msra.mxu0 0.0
        %510 = vmatprep.subr.mxu0 0.0
        %511 = vmatpush1.msra.mxu0 0.0
        %512 = vmatprep.subr.mxu0 0.0
        %513 = vmatpush1.msra.mxu0 0.0
        %514 = vmatprep.subr.mxu0 0.0
        %515 = vmatpush1.msra.mxu0 0.0
        %516 = vmatprep.subr.mxu0 0.0
        %517 = vmatpush1.msra.mxu0 0.0
        %518 = vmatprep.subr.mxu0 0.0
        %519 = vmatpush1.msra.mxu0 0.0
        %520 = vmatprep.subr.mxu0 0.0
        %521 = vmatpush1.msra.mxu0 0.0
        %522 = vmatprep.subr.mxu0 0.0
        %523 = vmatpush1.msra.mxu0 0.0
        %524 = vmatprep.subr.mxu0 0.0
        %525 = vmatpush1.msra.mxu0 0.0
        %526 = vmatprep.subr.mxu0 0.0
        %527 = vmatpush1.msra.mxu0 0.0
        %528 = vmatprep.subr.mxu0 0.0
        %529 = vmatpush1.msra.mxu0 0.0
        %530 = vmatprep.subr.mxu0 0.0
        %531 = vmatpush1.msra.mxu0 0.0
        %532 = vmatprep.subr.mxu0 0.0
        %533 = vmatpush1.msra.mxu0 0.0
        %534 = vmatprep.subr.mxu0 0.0
        %535 = vmatpush1.msra.mxu0 0.0
        %536 = vmatprep.subr.mxu0 0.0
        %537 = vmatpush1.msra.mxu0 0.0
        %538 = vmatprep.subr.mxu0 0.0
        %539 = vmatpush1.msra.mxu0 0.0
        %540 = vmatprep.subr.mxu0 0.0
        %541 = vmatpush1.msra.mxu0 0.0
        %542 = vmatprep.subr.mxu0 0.0
        %543 = vmatpush1.msra.mxu0 0.0
        %544 = vmatprep.subr.mxu0 0.0
        %545 = vmatpush1.msra.mxu0 0.0
        %546 = vmatprep.subr.mxu0 0.0
        %547 = vmatpush1.msra.mxu0 0.0
        %548 = vmatprep.subr.mxu0 0.0
        %549 = vmatpush1.msra.mxu0 0.0
        %550 = vmatprep.subr.mxu0 0.0
        %551 = vmatpush1.msra.mxu0 0.0
        %552 = vmatprep.subr.mxu0 0.0
        %553 = vmatpush1.msra.mxu0 0.0
        %554 = vmatprep.subr.mxu0 0.0
        %555 = vmatpush1.msra.mxu0 0.0
        %556 = vmatprep.subr.mxu0 0.0
        %557 = vmatpush1.msra.mxu0 0.0
        %558 = vmatprep.subr.mxu0 0.0
        %559 = vmatpush1.msra.mxu0 0.0
        %560 = vmatprep.subr.mxu0 0.0
        %561 = vmatpush1.msra.mxu0 0.0
        %562 = vmatprep.subr.mxu0 0.0
        %563 = vmatpush1.msra.mxu0 0.0
        %564 = vmatprep.mubr.f32.mxu0 0.0
        %565 = vmatmul.mubr.f32.gmra.mrb[0].mxu0 %v498
        %v566 = vpop.f32.mrb[0].mxu0
        %v567 = vadd.f32 %v494, %v566
        %v568 = vpop.f32.mrb[0].mxu0
        %569 = vdwg.mxu0
        %vm570 = vcmask 523264
        %571 = vst.msk [vmem:[%s354] sm:$0xff] %vm570, %v567
        %s572 = sand.u32 %s209, 1
        %s573 = scalar_lea.sflag [#allocation5], %s572
        %s574 = sand.u32 %s209, 1
        %s575 = smul.addr %s574, 8
        %s576 = scalar_lea.vmem [#allocation9], %s575
        // Predicated region
        $region65: #{tpu_custom_call.1} parent=47 // pred_check
          %p577 = pneg %p219
        $region66: #{tpu_custom_call.1} parent=47 // pred_check_branch
          %579 = sbr.rel (%p577) target = $region68
        $region67: #{tpu_custom_call.1} parent=47 // pred_region
          %s581 = ssub.s32 128, 128
          %582 = vsyncadd %s573, %s581
          %s583 = sadd.s32 %s30, %s29
          %s584 = smul.addr %s583, 128
          %s585 = scalar_lea.hbm %s7, %s584
          %s587 = sshll.u32 %s576, 4
          %s588 = int_to_ptr.vmem [resolvable:$true] %s587
          %590 = dma.vmem_to_hbm [thread:$0]  %s588, 128, %s585, %s573
        $region68: #{tpu_custom_call.1} parent=47 // pred_fallthru
          _
      $region48: #{tpu_custom_call.1} parent=5 // pred_fallthru
        _
      %p591 = scmp.le.s32.totalorder 2, %s20
      // Predicated region
      $region69: #{tpu_custom_call.1} parent=5 // pred_check
        %p592 = pneg %p591
      $region70: #{tpu_custom_call.1} parent=5 // pred_check_branch
        %594 = sbr.rel (%p592) target = $region72
      $region71: #{tpu_custom_call.1} parent=5 // pred_region
        %s595 = ssub.s32 %s20, 2
        // Predicated region
        $region73: #{tpu_custom_call.1} parent=71 // pred_check
          %p596 = pneg %p225
        $region74: #{tpu_custom_call.1} parent=71 // pred_check_branch
          %598 = sbr.rel (%p596) target = $region76
        $region75: #{tpu_custom_call.1} parent=71 // pred_region
          %s599 = sand.u32 %s210, 1
          %s600 = scalar_lea.sflag [#allocation5], %s599
          %s601 = sand.u32 %s210, 1
          %s602 = smul.addr %s601, 8
          %s603 = scalar_lea.vmem [#allocation9], %s602
          %604 = dma.done %s600, 128
        $region76: #{tpu_custom_call.1} parent=71 // pred_fallthru
          _
      $region72: #{tpu_custom_call.1} parent=5 // pred_fallthru
        _
    $region6: #{tpu_custom_call.1} parent=1 // loop_footer
      %s24 = sadd.s32 1, %s20
    $region7: #{tpu_custom_call.1} parent=1 // loop_footer_branch
      %19 = sbr.rel target = $region3
    $region8: #{tpu_custom_call.1} parent=1 // loop_exit
      _
    %605 = vsyncpa [#allocation4], 1
    %s606 = scalar_lea.sflag [#allocation4], 1
    %607 = vsyncpa %s606, 1
    %608 = vsyncpa [#allocation7], 1
    %609 = vsyncpa [#allocation5], 1
    %s610 = scalar_lea.sflag [#allocation5], 1
    %611 = vsyncpa %s610, 1

</llo_original>
